<compile_context>
chip_gen: v5e
topology: v5e:2x2
jax: 0.10.0
libtpu: 0.0.40
codegen_flags: <defaults>
</compile_context>

<pallas_src>
import jax
import jax.numpy as jnp
import numpy as np
from jax.experimental import pallas as pl
from jax.experimental.pallas import tpu as pltpu

LANE = 128      # TPU lane width
ROW_PAD = 256   # v6e/v7x MXU native tile (multiple of v5e's 128)


def _round_up(x, m):
    return ((x + m - 1) // m) * m


def _vmem_budget_bytes():
    """Scoped-VMEM budget per generation (conservative for v7x / unknown)."""
    kind = ""
    try:
        kind = jax.devices()[0].device_kind.lower()
    except Exception:
        pass
    if ("v5" in kind) or ("v6" in kind) or ("v4" in kind):
        return 100 * 1024 * 1024       # 128 MiB physical VMEM
    return 48 * 1024 * 1024            # v7x: 64 MiB physical VMEM


def _prop_vmem_bytes(tm, tk, tn):
    """Double-buffered working set of one propagation kernel instance."""
    a = 2 * tm * tk * 2                # A tile, bf16, x2 buffers
    b = 2 * tk * tn * 2                # B tile, bf16, x2 buffers
    acc_in = 2 * tm * tn * 4           # f32 running sum in
    e_out = 2 * tm * tn * 2            # bf16 activation out
    acc_out = 2 * tm * tn * 4          # f32 running sum out
    scratch = tm * tn * 4              # f32 accumulator scratch
    return a + b + acc_in + e_out + acc_out + scratch


def _choose_tiles(u_dim, i_dim, tn, usable_bytes):
    """Largest MXU-aligned row tiles whose working set fits the VMEM budget."""
    cands = [4096, 2048, 1024, 512, 256]

    def best(d):
        base = _round_up(d, ROW_PAD)
        for c in cands:
            if c <= base:
                return c
        return base

    tu, ti = best(u_dim), best(i_dim)

    def fits(a, b):
        return max(_prop_vmem_bytes(a, b, tn),
                   _prop_vmem_bytes(b, a, tn)) <= usable_bytes

    while not fits(tu, ti):
        if tu >= ti and tu > 256:
            tu = cands[cands.index(tu) + 1]
        elif ti > 256:
            ti = cands[cands.index(ti) + 1]
        else:
            break
    return tu, ti


# ----------------------------------------------------------------------------
# Kernel 1: one bipartite propagation half-step, fused epilogue.
#   out_e   = bf16( A @ B )                    (activation for the next layer)
#   out_acc = acc_in + (A @ B)                 (running layer sum, f32, aliased)
# ----------------------------------------------------------------------------
def _prop_kernel(a_ref, b_ref, accin_ref, e_out_ref, acc_out_ref, acc_ref):
    @pl.when(pl.program_id(2) == 0)
    def _init():
        acc_ref[...] = jnp.zeros_like(acc_ref)

    acc_ref[...] += jnp.dot(a_ref[...], b_ref[...],
                            preferred_element_type=jnp.float32)

    @pl.when(pl.program_id(2) == pl.num_programs(2) - 1)
    def _store():
        e_out_ref[...] = acc_ref[...].astype(e_out_ref.dtype)
        acc_out_ref[...] = accin_ref[...] + acc_ref[...]


def pallas_propagate(a_bf16, b_bf16, acc_in, *, tm, tk, tn, vmem_limit):
    """(M,K)bf16 @ (K,N)bf16 -> (bf16 activation, f32 acc_in + result)."""
    M, K = a_bf16.shape
    K2, N = b_bf16.shape
    assert K == K2 and M % tm == 0 and K % tk == 0 and N % tn == 0
    assert acc_in.shape == (M, N) and acc_in.dtype == jnp.float32
    grid = (M // tm, N // tn, K // tk)
    return pl.pallas_call(
        _prop_kernel,
        out_shape=(jax.ShapeDtypeStruct((M, N), jnp.bfloat16),
                   jax.ShapeDtypeStruct((M, N), jnp.float32)),
        grid_spec=pltpu.PrefetchScalarGridSpec(
            num_scalar_prefetch=0,
            grid=grid,
            in_specs=[
                pl.BlockSpec((tm, tk), lambda i, j, k: (i, k)),
                pl.BlockSpec((tk, tn), lambda i, j, k: (k, j)),
                pl.BlockSpec((tm, tn), lambda i, j, k: (i, j)),
            ],
            out_specs=[
                pl.BlockSpec((tm, tn), lambda i, j, k: (i, j)),
                pl.BlockSpec((tm, tn), lambda i, j, k: (i, j)),
            ],
            scratch_shapes=[pltpu.VMEM((tm, tn), jnp.float32)],
        ),
        input_output_aliases={2: 1},     # acc_in -> acc_out (in-place layer sum)
        compiler_params=pltpu.CompilerParams(
            dimension_semantics=("parallel", "parallel", "arbitrary"),
            vmem_limit_bytes=vmem_limit),
    )(a_bf16, b_bf16, acc_in)


# ----------------------------------------------------------------------------
# Kernel 2: per-pair inner product, batch-tiled, lane-dense output (1, tb)
# ----------------------------------------------------------------------------
def _gamma_kernel(u_ref, i_ref, out_ref):
    prod = u_ref[...] * i_ref[...]                         # (D_pad, tb) f32
    out_ref[...] = jnp.sum(prod, axis=0, keepdims=True)    # (1, tb) lane-dense


def ltocf_gamma(users_emb, items_emb, *, tb_max=1024):
    """users_emb, items_emb: (B, D_pad) float32 -> gamma (B,)."""
    B, Dp = users_emb.shape
    tb = min(tb_max, _round_up(max(B, LANE), LANE))
    B_pad = _round_up(max(B, LANE), tb)
    u_t = jnp.pad(users_emb, ((0, B_pad - B), (0, 0))).T   # (D_pad, B_pad)
    i_t = jnp.pad(items_emb, ((0, B_pad - B), (0, 0))).T
    out = pl.pallas_call(
        _gamma_kernel,
        out_shape=jax.ShapeDtypeStruct((1, B_pad), jnp.float32),
        grid=(B_pad // tb,),
        in_specs=[
            pl.BlockSpec((Dp, tb), lambda b: (0, b)),
            pl.BlockSpec((Dp, tb), lambda b: (0, b)),
        ],
        out_specs=pl.BlockSpec((1, tb), lambda b: (0, b)),
    )(u_t, i_t)
    return out[0, :B]


# ----------------------------------------------------------------------------
# Model wrapper (parameter setup, graph normalization, gathers = XLA glue)
# ----------------------------------------------------------------------------
class LTOCF:
    def __init__(self, num_users, num_items, latent_dim, K=4.0, time_split=4, seed=0):
        self.num_users = num_users
        self.num_items = num_items
        self.latent_dim = latent_dim
        self.n_blocks = time_split   # 4 ODE blocks in the fixed-time path

        key = jax.random.PRNGKey(seed)
        k_u, k_i, k_g = jax.random.split(key, 3)
        # nn.init.normal_(..., std=0.1)
        self.embedding_user = 0.1 * jax.random.normal(
            k_u, (num_users, latent_dim), dtype=jnp.float32)
        self.embedding_item = 0.1 * jax.random.normal(
            k_i, (num_items, latent_dim), dtype=jnp.float32)

        # Synthetic interaction matrix R (stand-in for dataset.getSparseGraph()).
        # The symmetric-normalized bipartite adjacency is A = [[0, Rn], [Rn^T, 0]];
        # only Rn (and its transpose) is materialized.
        R = (jax.random.uniform(k_g, (num_users, num_items)) < 0.3).astype(jnp.float32)
        deg_u = jnp.sum(R, axis=1)
        deg_i = jnp.sum(R, axis=0)
        du = jnp.where(deg_u > 0, 1.0 / jnp.sqrt(jnp.maximum(deg_u, 1e-12)), 0.0)
        di = jnp.where(deg_i > 0, 1.0 / jnp.sqrt(jnp.maximum(deg_i, 1e-12)), 0.0)
        R_norm = R * du[:, None] * di[None, :]

        # ODE time splits -> equal euler step sizes h = K / time_split; since every
        # block uses the same h, fold it into the adjacency once.
        splits = [K * t / time_split for t in range(1, time_split)]
        bounds = [0.0] + splits + [K]
        steps = [bounds[i + 1] - bounds[i] for i in range(len(bounds) - 1)]
        assert all(abs(s - steps[0]) < 1e-9 for s in steps)
        h = steps[0]

        # Generation-aware tile / VMEM-budget selection.
        self._vmem_limit = _vmem_budget_bytes()
        usable = (self._vmem_limit * 3) // 4
        self._D_pad = _round_up(latent_dim, LANE)
        self._tn = LANE
        self._tile_u, self._tile_i = _choose_tiles(
            num_users, num_items, self._tn, usable)

        # Row dims padded to a multiple of their own tile -> no divisibility
        # fallback, always large MXU-aligned tiles.
        self._U_pad = _round_up(num_users, self._tile_u)
        self._I_pad = _round_up(num_items, self._tile_i)

        # Padded, bf16-quantized adjacency halves (MXU-aligned layout).
        Rh = jnp.zeros((self._U_pad, self._I_pad), jnp.float32)
        Rh = Rh.at[:num_users, :num_items].set(h * R_norm)
        self._Rh_bf16 = Rh.astype(jnp.bfloat16)
        self._RhT_bf16 = jnp.asarray(self._Rh_bf16.T)

        # jit the full forward once: propagation kernels + gathers + gamma fuse
        # into one XLA program (no per-op dispatch overhead).
        self._forward_fn = jax.jit(self._forward_impl)

    # ---- traced implementation (all arrays passed explicitly) ----------------
    def _computer_impl(self, emb_u, emb_i, Rh, RhT):
        U, I, D = self.num_users, self.num_items, self.latent_dim
        eu = jnp.zeros((self._U_pad, self._D_pad), jnp.float32)
        eu = eu.at[:U, :D].set(emb_u)
        ei = jnp.zeros((self._I_pad, self._D_pad), jnp.float32)
        ei = ei.at[:I, :D].set(emb_i)

        acc_u, acc_i = eu, ei                       # running layer sums (f32)
        cu = eu.astype(jnp.bfloat16)                # current activations (bf16)
        ci = ei.astype(jnp.bfloat16)
        for _ in range(self.n_blocks):
            # e_k = h * A @ e_{k-1}, split into the two nonzero bipartite blocks;
            # the kernel also folds in the bf16 cast and the layer-sum update.
            cu_new, acc_u = pallas_propagate(
                Rh, ci, acc_u, tm=self._tile_u, tk=self._tile_i,
                tn=self._tn, vmem_limit=self._vmem_limit)
            ci_new, acc_i = pallas_propagate(
                RhT, cu, acc_i, tm=self._tile_i, tk=self._tile_u,
                tn=self._tn, vmem_limit=self._vmem_limit)
            cu, ci = cu_new, ci_new
        inv = 1.0 / float(self.n_blocks + 1)
        return acc_u[:U] * inv, acc_i[:I] * inv     # columns stay padded to D_pad

    def _forward_impl(self, emb_u, emb_i, Rh, RhT, users, items):
        all_users, all_items = self._computer_impl(emb_u, emb_i, Rh, RhT)
        users_emb = jnp.take(all_users, users, axis=0)   # gather (XLA glue)
        items_emb = jnp.take(all_items, items, axis=0)   # gather (XLA glue)
        return ltocf_gamma(users_emb, items_emb)

    # ---- public API ----------------------------------------------------------
    def computer(self):
        return jax.jit(self._computer_impl)(
            self.embedding_user, self.embedding_item,
            self._Rh_bf16, self._RhT_bf16)

    def forward(self, users, items):
        return self._forward_fn(self.embedding_user, self.embedding_item,
                                self._Rh_bf16, self._RhT_bf16, users, items)

    # Pure-JAX reference using the same bf16-quantized adjacency / activations.
    def forward_ref(self, users, items):
        U, I = self.num_users, self.num_items
        Rh = self._Rh_bf16[:U, :I]
        RhT = Rh.T
        cu = self.embedding_user.astype(jnp.bfloat16)
        ci = self.embedding_item.astype(jnp.bfloat16)
        acc_u = self.embedding_user
        acc_i = self.embedding_item
        for _ in range(self.n_blocks):
            nu = jnp.dot(Rh, ci, preferred_element_type=jnp.float32)
            ni = jnp.dot(RhT, cu, preferred_element_type=jnp.float32)
            cu, ci = nu.astype(jnp.bfloat16), ni.astype(jnp.bfloat16)
            acc_u = acc_u + nu
            acc_i = acc_i + ni
        inv = 1.0 / float(self.n_blocks + 1)
        u = (acc_u * inv)[users]
        it = (acc_i * inv)[items]
        return jnp.sum(u * it, axis=1)


if __name__ == "__main__":
    num_users, num_items, latent_dim = 12, 20, 32
    model = LTOCF(num_users, num_items, latent_dim, K=4.0, time_split=4, seed=0)

    key = jax.random.PRNGKey(0)
    k_u, k_i = jax.random.split(key)
    batch = 8
    users = jax.random.randint(k_u, (batch,), 0, num_users, dtype=jnp.int32)
    items = jax.random.randint(k_i, (batch,), 0, num_items, dtype=jnp.int32)

    gamma = jax.block_until_ready(model.forward(users, items))
    ref = jax.block_until_ready(model.forward_ref(users, items))

    assert gamma.shape == (batch,)
    np.testing.assert_allclose(np.asarray(gamma), np.asarray(ref),
                               rtol=1e-4, atol=1e-5)

    print("KERNEL_OK")
</pallas_src>

<mosaic_0001>
module attributes {stable_mosaic.version = 11 : i64} {
  func.func @_prop_kernel(%arg0: i32, %arg1: i32, %arg2: i32, %arg3: memref<256x256xbf16, #tpu.memory_space<vmem>>, %arg4: memref<256x128xbf16, #tpu.memory_space<vmem>>, %arg5: memref<256x128xf32, #tpu.memory_space<vmem>>, %arg6: memref<256x128xbf16, #tpu.memory_space<vmem>>, %arg7: memref<256x128xf32, #tpu.memory_space<vmem>>, %arg8: memref<256x128xf32, #tpu.memory_space<vmem>>) attributes {dimension_semantics = [#tpu.dimension_semantics<parallel>, #tpu.dimension_semantics<parallel>, #tpu.dimension_semantics<arbitrary>], iteration_bounds = array<i64: 1, 1, 1>, scalar_prefetch = 0 : i64, scratch_operands = 1 : i64, tpu.core_type = #tpu.core_type<tc>, window_params = [{transform_indices = @transform_0, window_bounds = array<i64: 256, 256>}, {transform_indices = @transform_1, window_bounds = array<i64: 256, 128>}, {transform_indices = @transform_2, window_bounds = array<i64: 256, 128>}, {transform_indices = @transform_3, window_bounds = array<i64: 256, 128>}, {transform_indices = @transform_4, window_bounds = array<i64: 256, 128>}]} {
    %c0_i32 = arith.constant 0 : i32
    %0 = arith.cmpi eq, %arg2, %c0_i32 : i32
    %1 = arith.extui %0 : i1 to i32
    %c0_i32_0 = arith.constant 0 : i32
    %2 = arith.cmpi ne, %1, %c0_i32_0 : i32
    scf.if %2 {
      %cst_10 = arith.constant 0.000000e+00 : f32
      %12 = vector.broadcast %cst_10 : f32 to vector<256x128xf32>
      %c0_11 = arith.constant 0 : index
      %c0_12 = arith.constant 0 : index
      %13 = vector.load %arg8[%c0_11, %c0_12] : memref<256x128xf32, #tpu.memory_space<vmem>>, vector<256x128xf32>
      tpu.vector_store %arg8[%c0_11, %c0_12], %12 {strides = array<i32>} : memref<256x128xf32, #tpu.memory_space<vmem>>, vector<256x128xf32>,
    } else {
    }
    %c0 = arith.constant 0 : index
    %c0_1 = arith.constant 0 : index
    %3 = vector.load %arg8[%c0, %c0_1] : memref<256x128xf32, #tpu.memory_space<vmem>>, vector<256x128xf32>
    %c0_2 = arith.constant 0 : index
    %c0_3 = arith.constant 0 : index
    %4 = vector.load %arg3[%c0_2, %c0_3] : memref<256x256xbf16, #tpu.memory_space<vmem>>, vector<256x256xbf16>
    %c0_4 = arith.constant 0 : index
    %c0_5 = arith.constant 0 : index
    %5 = vector.load %arg4[%c0_4, %c0_5] : memref<256x128xbf16, #tpu.memory_space<vmem>>, vector<256x128xbf16>
    %cst = arith.constant dense<0.000000e+00> : vector<256x128xf32>
    %6 = tpu.matmul %4, %5, %cst {dimension_numbers = #tpu.dot_dimension_numbers<[1], [0], [0], [1], [0, 0, 1, 1], [], []>} : vector<256x256xbf16>, vector<256x128xbf16>, vector<256x128xf32> -> vector<256x128xf32>
    %7 = arith.addf %3, %6 : vector<256x128xf32>
    %c0_6 = arith.constant 0 : index
    %c0_7 = arith.constant 0 : index
    %8 = vector.load %arg8[%c0_6, %c0_7] : memref<256x128xf32, #tpu.memory_space<vmem>>, vector<256x128xf32>
    tpu.vector_store %arg8[%c0_6, %c0_7], %7 {strides = array<i32>} : memref<256x128xf32, #tpu.memory_space<vmem>>, vector<256x128xf32>,
    %c0_i32_8 = arith.constant 0 : i32
    %9 = arith.cmpi eq, %arg2, %c0_i32_8 : i32
    %10 = arith.extui %9 : i1 to i32
    %c0_i32_9 = arith.constant 0 : i32
    %11 = arith.cmpi ne, %10, %c0_i32_9 : i32
    scf.if %11 {
      %c0_10 = arith.constant 0 : index
      %c0_11 = arith.constant 0 : index
      %12 = vector.load %arg8[%c0_10, %c0_11] : memref<256x128xf32, #tpu.memory_space<vmem>>, vector<256x128xf32>
      %13 = arith.truncf %12 : vector<256x128xf32> to vector<256x128xbf16>
      %c0_12 = arith.constant 0 : index
      %c0_13 = arith.constant 0 : index
      %14 = vector.load %arg6[%c0_12, %c0_13] : memref<256x128xbf16, #tpu.memory_space<vmem>>, vector<256x128xbf16>
      tpu.vector_store %arg6[%c0_12, %c0_13], %13 {strides = array<i32>} : memref<256x128xbf16, #tpu.memory_space<vmem>>, vector<256x128xbf16>,
      %c0_14 = arith.constant 0 : index
      %c0_15 = arith.constant 0 : index
      %15 = vector.load %arg5[%c0_14, %c0_15] : memref<256x128xf32, #tpu.memory_space<vmem>>, vector<256x128xf32>
      %c0_16 = arith.constant 0 : index
      %c0_17 = arith.constant 0 : index
      %16 = vector.load %arg8[%c0_16, %c0_17] : memref<256x128xf32, #tpu.memory_space<vmem>>, vector<256x128xf32>
      %17 = arith.addf %15, %16 : vector<256x128xf32>
      %c0_18 = arith.constant 0 : index
      %c0_19 = arith.constant 0 : index
      %18 = vector.load %arg7[%c0_18, %c0_19] : memref<256x128xf32, #tpu.memory_space<vmem>>, vector<256x128xf32>
      tpu.vector_store %arg7[%c0_18, %c0_19], %17 {strides = array<i32>} : memref<256x128xf32, #tpu.memory_space<vmem>>, vector<256x128xf32>,
    } else {
    }
    return
  }
  func.func @transform_0(%arg0: i32, %arg1: i32, %arg2: i32) -> (i32, i32) {
    %c0_i32 = arith.constant 0 : i32
    return %arg0, %arg2 : i32, i32
  }
  func.func @transform_1(%arg0: i32, %arg1: i32, %arg2: i32) -> (i32, i32) {
    %c0_i32 = arith.constant 0 : i32
    return %arg2, %arg1 : i32, i32
  }
  func.func @transform_2(%arg0: i32, %arg1: i32, %arg2: i32) -> (i32, i32) {
    %c0_i32 = arith.constant 0 : i32
    return %arg0, %arg1 : i32, i32
  }
  func.func @transform_3(%arg0: i32, %arg1: i32, %arg2: i32) -> (i32, i32) {
    %c0_i32 = arith.constant 0 : i32
    return %arg0, %arg1 : i32, i32
  }
  func.func @transform_4(%arg0: i32, %arg1: i32, %arg2: i32) -> (i32, i32) {
    %c0_i32 = arith.constant 0 : i32
    return %arg0, %arg1 : i32, i32
  }
}

module attributes {stable_mosaic.version = 11 : i64} {
  func.func @_prop_kernel(%arg0: i32, %arg1: i32, %arg2: i32, %arg3: memref<256x256xbf16, #tpu.memory_space<vmem>>, %arg4: memref<256x128xbf16, #tpu.memory_space<vmem>>, %arg5: memref<256x128xf32, #tpu.memory_space<vmem>>, %arg6: memref<256x128xbf16, #tpu.memory_space<vmem>>, %arg7: memref<256x128xf32, #tpu.memory_space<vmem>>, %arg8: memref<256x128xf32, #tpu.memory_space<vmem>>) attributes {dimension_semantics = [#tpu.dimension_semantics<parallel>, #tpu.dimension_semantics<parallel>, #tpu.dimension_semantics<arbitrary>], iteration_bounds = array<i64: 1, 1, 1>, scalar_prefetch = 0 : i64, scratch_operands = 1 : i64, tpu.core_type = #tpu.core_type<tc>, window_params = [{transform_indices = @transform_0, window_bounds = array<i64: 256, 256>}, {transform_indices = @transform_1, window_bounds = array<i64: 256, 128>}, {transform_indices = @transform_2, window_bounds = array<i64: 256, 128>}, {transform_indices = @transform_3, window_bounds = array<i64: 256, 128>}, {transform_indices = @transform_4, window_bounds = array<i64: 256, 128>}]} {
    %c0_i32 = arith.constant 0 : i32
    %0 = arith.cmpi eq, %arg2, %c0_i32 : i32
    %1 = arith.extui %0 : i1 to i32
    %c0_i32_0 = arith.constant 0 : i32
    %2 = arith.cmpi ne, %1, %c0_i32_0 : i32
    scf.if %2 {
      %cst_10 = arith.constant 0.000000e+00 : f32
      %12 = vector.broadcast %cst_10 : f32 to vector<256x128xf32>
      %c0_11 = arith.constant 0 : index
      %c0_12 = arith.constant 0 : index
      %13 = vector.load %arg8[%c0_11, %c0_12] : memref<256x128xf32, #tpu.memory_space<vmem>>, vector<256x128xf32>
      tpu.vector_store %arg8[%c0_11, %c0_12], %12 {strides = array<i32>} : memref<256x128xf32, #tpu.memory_space<vmem>>, vector<256x128xf32>,
    } else {
    }
    %c0 = arith.constant 0 : index
    %c0_1 = arith.constant 0 : index
    %3 = vector.load %arg8[%c0, %c0_1] : memref<256x128xf32, #tpu.memory_space<vmem>>, vector<256x128xf32>
    %c0_2 = arith.constant 0 : index
    %c0_3 = arith.constant 0 : index
    %4 = vector.load %arg3[%c0_2, %c0_3] : memref<256x256xbf16, #tpu.memory_space<vmem>>, vector<256x256xbf16>
    %c0_4 = arith.constant 0 : index
    %c0_5 = arith.constant 0 : index
    %5 = vector.load %arg4[%c0_4, %c0_5] : memref<256x128xbf16, #tpu.memory_space<vmem>>, vector<256x128xbf16>
    %cst = arith.constant dense<0.000000e+00> : vector<256x128xf32>
    %6 = tpu.matmul %4, %5, %cst {dimension_numbers = #tpu.dot_dimension_numbers<[1], [0], [0], [1], [0, 0, 1, 1], [], []>} : vector<256x256xbf16>, vector<256x128xbf16>, vector<256x128xf32> -> vector<256x128xf32>
    %7 = arith.addf %3, %6 : vector<256x128xf32>
    %c0_6 = arith.constant 0 : index
    %c0_7 = arith.constant 0 : index
    %8 = vector.load %arg8[%c0_6, %c0_7] : memref<256x128xf32, #tpu.memory_space<vmem>>, vector<256x128xf32>
    tpu.vector_store %arg8[%c0_6, %c0_7], %7 {strides = array<i32>} : memref<256x128xf32, #tpu.memory_space<vmem>>, vector<256x128xf32>,
    %c0_i32_8 = arith.constant 0 : i32
    %9 = arith.cmpi eq, %arg2, %c0_i32_8 : i32
    %10 = arith.extui %9 : i1 to i32
    %c0_i32_9 = arith.constant 0 : i32
    %11 = arith.cmpi ne, %10, %c0_i32_9 : i32
    scf.if %11 {
      %c0_10 = arith.constant 0 : index
      %c0_11 = arith.constant 0 : index
      %12 = vector.load %arg8[%c0_10, %c0_11] : memref<256x128xf32, #tpu.memory_space<vmem>>, vector<256x128xf32>
      %13 = arith.truncf %12 : vector<256x128xf32> to vector<256x128xbf16>
      %c0_12 = arith.constant 0 : index
      %c0_13 = arith.constant 0 : index
      %14 = vector.load %arg6[%c0_12, %c0_13] : memref<256x128xbf16, #tpu.memory_space<vmem>>, vector<256x128xbf16>
      tpu.vector_store %arg6[%c0_12, %c0_13], %13 {strides = array<i32>} : memref<256x128xbf16, #tpu.memory_space<vmem>>, vector<256x128xbf16>,
      %c0_14 = arith.constant 0 : index
      %c0_15 = arith.constant 0 : index
      %15 = vector.load %arg5[%c0_14, %c0_15] : memref<256x128xf32, #tpu.memory_space<vmem>>, vector<256x128xf32>
      %c0_16 = arith.constant 0 : index
      %c0_17 = arith.constant 0 : index
      %16 = vector.load %arg8[%c0_16, %c0_17] : memref<256x128xf32, #tpu.memory_space<vmem>>, vector<256x128xf32>
      %17 = arith.addf %15, %16 : vector<256x128xf32>
      %c0_18 = arith.constant 0 : index
      %c0_19 = arith.constant 0 : index
      %18 = vector.load %arg7[%c0_18, %c0_19] : memref<256x128xf32, #tpu.memory_space<vmem>>, vector<256x128xf32>
      tpu.vector_store %arg7[%c0_18, %c0_19], %17 {strides = array<i32>} : memref<256x128xf32, #tpu.memory_space<vmem>>, vector<256x128xf32>,
    } else {
    }
    return
  }
  func.func @transform_0(%arg0: i32, %arg1: i32, %arg2: i32) -> (i32, i32) {
    %c0_i32 = arith.constant 0 : i32
    return %arg0, %arg2 : i32, i32
  }
  func.func @transform_1(%arg0: i32, %arg1: i32, %arg2: i32) -> (i32, i32) {
    %c0_i32 = arith.constant 0 : i32
    return %arg2, %arg1 : i32, i32
  }
  func.func @transform_2(%arg0: i32, %arg1: i32, %arg2: i32) -> (i32, i32) {
    %c0_i32 = arith.constant 0 : i32
    return %arg0, %arg1 : i32, i32
  }
  func.func @transform_3(%arg0: i32, %arg1: i32, %arg2: i32) -> (i32, i32) {
    %c0_i32 = arith.constant 0 : i32
    return %arg0, %arg1 : i32, i32
  }
  func.func @transform_4(%arg0: i32, %arg1: i32, %arg2: i32) -> (i32, i32) {
    %c0_i32 = arith.constant 0 : i32
    return %arg0, %arg1 : i32, i32
  }
}

module attributes {stable_mosaic.version = 11 : i64} {
  func.func @_gamma_kernel(%arg0: i32, %arg1: memref<128x128xf32, #tpu.memory_space<vmem>>, %arg2: memref<128x128xf32, #tpu.memory_space<vmem>>, %arg3: memref<1x128xf32, #tpu.memory_space<vmem>>) attributes {dimension_semantics = [#tpu.dimension_semantics<arbitrary>], iteration_bounds = array<i64: 1>, scalar_prefetch = 0 : i64, scratch_operands = 0 : i64, tpu.core_type = #tpu.core_type<tc>, window_params = [{transform_indices = @transform_0, window_bounds = array<i64: 128, 128>}, {transform_indices = @transform_1, window_bounds = array<i64: 128, 128>}, {transform_indices = @transform_2, window_bounds = array<i64: 1, 128>}]} {
    %c0 = arith.constant 0 : index
    %c0_0 = arith.constant 0 : index
    %0 = vector.load %arg1[%c0, %c0_0] : memref<128x128xf32, #tpu.memory_space<vmem>>, vector<128x128xf32>
    %c0_1 = arith.constant 0 : index
    %c0_2 = arith.constant 0 : index
    %1 = vector.load %arg2[%c0_1, %c0_2] : memref<128x128xf32, #tpu.memory_space<vmem>>, vector<128x128xf32>
    %2 = arith.mulf %0, %1 : vector<128x128xf32>
    %cst = arith.constant dense<0.000000e+00> : vector<128xf32>
    %3 = vector.multi_reduction <add>, %2, %cst [0] : vector<128x128xf32> to vector<128xf32>
    %4 = vector.shape_cast %3 : vector<128xf32> to vector<1x128xf32>
    %c0_3 = arith.constant 0 : index
    %c0_4 = arith.constant 0 : index
    %5 = vector.load %arg3[%c0_3, %c0_4] : memref<1x128xf32, #tpu.memory_space<vmem>>, vector<1x128xf32>
    tpu.vector_store %arg3[%c0_3, %c0_4], %4 {strides = array<i32>} : memref<1x128xf32, #tpu.memory_space<vmem>>, vector<1x128xf32>,
    return
  }
  func.func @transform_0(%arg0: i32) -> (i32, i32) {
    %c0_i32 = arith.constant 0 : i32
    %c0_i32_0 = arith.constant 0 : i32
    return %c0_i32, %arg0 : i32, i32
  }
  func.func @transform_1(%arg0: i32) -> (i32, i32) {
    %c0_i32 = arith.constant 0 : i32
    %c0_i32_0 = arith.constant 0 : i32
    return %c0_i32, %arg0 : i32, i32
  }
  func.func @transform_2(%arg0: i32) -> (i32, i32) {
    %c0_i32 = arith.constant 0 : i32
    %c0_i32_0 = arith.constant 0 : i32
    return %c0_i32, %arg0 : i32, i32
  }
}

</mosaic_0001>

<llo_original>
// kernel: _forward_impl.17
$region0: #{_forward_impl.17}
  #allocation0 [shape = 'u32[]', space=smem, size = 0x4, offset = 0x4, fixed_abs, tag = 'smem constant byte address 0x4 - core index']
  #allocation1 [shape = 'u32[72,128]{1,0:T(1,128)}', space=vmem, size = 0x9000, scoped, tag = 'internal scratch']
  %s0 = inlined_call_operand.vmem [shape: f32[128,128], index: 0, kind: input, shape index: {}]
  %s1 = inlined_call_operand.vmem [shape: f32[128,128], index: 1, kind: input, shape index: {}]
  %s2 = inlined_call_operand.vmem [shape: f32[1,128], index: 2, kind: output, shape index: {}]
  %s3 = sld [smem:[#allocation0]]
  $region18: #{_forward_impl.17} parent=0
    _
  %s5 = ssub.s32 1, %s3
  %s6 = scalar_select 0, %s5, %s3
  // Predicated region
  $region2: #{_forward_impl.17} parent=0 // pred_check
    _
  $region3: #{_forward_impl.17} parent=0 // pred_check_branch
    %8 = sbr.rel (0) target = $region5
  $region4: #{_forward_impl.17} parent=0 // pred_region
    _
  $region5: #{_forward_impl.17} parent=0 // pred_fallthru
    _
  // Predicated region
  $region6: #{_forward_impl.17} parent=0 // pred_check
    _
  $region7: #{_forward_impl.17} parent=0 // pred_check_branch
    %10 = sbr.rel (0) target = $region9
  $region8: #{_forward_impl.17} parent=0 // pred_region
    _
  $region9: #{_forward_impl.17} parent=0 // pred_fallthru
    _
  %v11 = vld [vmem:[%s0] sm:$0xff]
  %v12 = vld [vmem:[%s0 + $0x8] sm:$0xff]
  %v13 = vld [vmem:[%s0 + $0x10] sm:$0xff]
  %v14 = vld [vmem:[%s0 + $0x18] sm:$0xff]
  %v15 = vld [vmem:[%s0 + $0x20] sm:$0xff]
  %v16 = vld [vmem:[%s0 + $0x28] sm:$0xff]
  %v17 = vld [vmem:[%s0 + $0x30] sm:$0xff]
  %v18 = vld [vmem:[%s0 + $0x38] sm:$0xff]
  %v19 = vld [vmem:[%s0 + $0x40] sm:$0xff]
  %v20 = vld [vmem:[%s0 + $0x48] sm:$0xff]
  %v21 = vld [vmem:[%s0 + $0x50] sm:$0xff]
  %v22 = vld [vmem:[%s0 + $0x58] sm:$0xff]
  %v23 = vld [vmem:[%s0 + $0x60] sm:$0xff]
  %v24 = vld [vmem:[%s0 + $0x68] sm:$0xff]
  %v25 = vld [vmem:[%s0 + $0x70] sm:$0xff]
  %v26 = vld [vmem:[%s0 + $0x78] sm:$0xff]
  %v27 = vld [vmem:[%s1] sm:$0xff]
  %v28 = vld [vmem:[%s1 + $0x8] sm:$0xff]
  %v29 = vld [vmem:[%s1 + $0x10] sm:$0xff]
  %v30 = vld [vmem:[%s1 + $0x18] sm:$0xff]
  %v31 = vld [vmem:[%s1 + $0x20] sm:$0xff]
  %v32 = vld [vmem:[%s1 + $0x28] sm:$0xff]
  %v33 = vld [vmem:[%s1 + $0x30] sm:$0xff]
  %v34 = vld [vmem:[%s1 + $0x38] sm:$0xff]
  %v35 = vld [vmem:[%s1 + $0x40] sm:$0xff]
  %v36 = vld [vmem:[%s1 + $0x48] sm:$0xff]
  %v37 = vld [vmem:[%s1 + $0x50] sm:$0xff]
  %v38 = vld [vmem:[%s1 + $0x58] sm:$0xff]
  %v39 = vld [vmem:[%s1 + $0x60] sm:$0xff]
  %v40 = vld [vmem:[%s1 + $0x68] sm:$0xff]
  %v41 = vld [vmem:[%s1 + $0x70] sm:$0xff]
  %v42 = vld [vmem:[%s1 + $0x78] sm:$0xff]
  %v43 = vmul.f32 %v11, %v27
  %v44 = vmul.f32 %v12, %v28
  %v45 = vmul.f32 %v13, %v29
  %v46 = vmul.f32 %v14, %v30
  %v47 = vmul.f32 %v15, %v31
  %v48 = vmul.f32 %v16, %v32
  %v49 = vmul.f32 %v17, %v33
  %v50 = vmul.f32 %v18, %v34
  %v51 = vmul.f32 %v19, %v35
  %v52 = vmul.f32 %v20, %v36
  %v53 = vmul.f32 %v21, %v37
  %v54 = vmul.f32 %v22, %v38
  %v55 = vmul.f32 %v23, %v39
  %v56 = vmul.f32 %v24, %v40
  %v57 = vmul.f32 %v25, %v41
  %v58 = vmul.f32 %v26, %v42
  %v59 = vadd.f32 %v43, %v44
  %v60 = vadd.f32 %v59, %v45
  %v61 = vadd.f32 %v60, %v46
  %v62 = vadd.f32 %v61, %v47
  %v63 = vadd.f32 %v62, %v48
  %v64 = vadd.f32 %v63, %v49
  %v65 = vadd.f32 %v64, %v50
  %v66 = vadd.f32 %v65, %v51
  %v67 = vadd.f32 %v66, %v52
  %v68 = vadd.f32 %v67, %v53
  %v69 = vadd.f32 %v68, %v54
  %v70 = vadd.f32 %v69, %v55
  %v71 = vadd.f32 %v70, %v56
  %v72 = vadd.f32 %v71, %v57
  %v73 = vadd.f32 %v72, %v58
  %v74 = vrot.slane %v73, 4
  %v75 = vadd.f32 %v73, %v74
  %v76 = vrot.slane %v75, 2
  %v77 = vadd.f32 %v75, %v76
  %v78 = vrot.slane %v77, 1
  %v79 = vadd.f32 %v77, %v78
  %80 = vst [vmem:[%s2] sm:$0x1] %v79
  // Predicated region
  $region10: #{_forward_impl.17} parent=0 // pred_check
    _
  $region11: #{_forward_impl.17} parent=0 // pred_check_branch
    %82 = sbr.rel (0) target = $region13
  $region12: #{_forward_impl.17} parent=0 // pred_region
    _
  $region13: #{_forward_impl.17} parent=0 // pred_fallthru
    _
  // Predicated region
  $region14: #{_forward_impl.17} parent=0 // pred_check
    _
  $region15: #{_forward_impl.17} parent=0 // pred_check_branch
    %84 = sbr.rel (0) target = $region17
  $region16: #{_forward_impl.17} parent=0 // pred_region
    _
  $region17: #{_forward_impl.17} parent=0 // pred_fallthru
    _

// kernel: _forward_impl.9
$region0: #{_forward_impl.9}
  #allocation0 [shape = 'u32[]', space=smem, size = 0x4, offset = 0x4, fixed_abs, tag = 'smem constant byte address 0x4 - core index']
  #allocation1 [shape = 'u32[72,128]{1,0:T(1,128)}', space=vmem, size = 0x9000, scoped, tag = 'internal scratch']
  #allocation2 [shape = 'f32[256,128]{1,0:T(8,128)}', space=vmem, size = 0x20000, scoped, tag = 'scratch operand']
  %s0 = inlined_call_operand.vmem [shape: bf16[256,256], index: 0, kind: input, shape index: {}]
  %s1 = inlined_call_operand.vmem [shape: bf16[256,128], index: 1, kind: input, shape index: {}]
  %s2 = inlined_call_operand.vmem [shape: f32[256,128], index: 2, kind: input, shape index: {}, may-alias: {2,4}]
  %s3 = inlined_call_operand.vmem [shape: bf16[256,128], index: 3, kind: output, shape index: {0}]
  %s4 = inlined_call_operand.vmem [shape: f32[256,128], index: 4, kind: output, shape index: {1}, may-alias: {2,4}]
  %5 = xla_tuple %s3, %s4
  %s6 = sld [smem:[#allocation0]]
  $region38: #{_forward_impl.9} parent=0
    _
  %s8 = ssub.s32 1, %s6
  %s9 = scalar_select 0, %s8, %s6
  // Predicated region
  $region2: #{_forward_impl.9} parent=0 // pred_check
    _
  $region3: #{_forward_impl.9} parent=0 // pred_check_branch
    %11 = sbr.rel (0) target = $region5
  $region4: #{_forward_impl.9} parent=0 // pred_region
    _
  $region5: #{_forward_impl.9} parent=0 // pred_fallthru
    _
  // Predicated region
  $region6: #{_forward_impl.9} parent=0 // pred_check
    _
  $region7: #{_forward_impl.9} parent=0 // pred_check_branch
    %13 = sbr.rel (0) target = $region9
  $region8: #{_forward_impl.9} parent=0 // pred_region
    _
  $region9: #{_forward_impl.9} parent=0 // pred_fallthru
    _
  // Predicated region
  $region10: #{_forward_impl.9} parent=0 // pred_check
    _
  $region11: #{_forward_impl.9} parent=0 // pred_check_branch
    %15 = sbr.rel (0) target = $region13
  $region12: #{_forward_impl.9} parent=0 // pred_region
    _
  $region13: #{_forward_impl.9} parent=0 // pred_fallthru
    _
  %p16 = scmp.eq.s32.totalorder 0, 0
  // Predicated region
  $region14: #{_forward_impl.9} parent=0 // pred_check
    %p17 = pneg %p16
  $region15: #{_forward_impl.9} parent=0 // pred_check_branch
    %19 = sbr.rel (%p17) target = $region17
  $region16: #{_forward_impl.9} parent=0 // pred_region
    %20 = vst [vmem:[#allocation2] sm:$0xff] 0.0
    %21 = vst [vmem:[#allocation2 + $0x8] sm:$0xff] 0.0
    %22 = vst [vmem:[#allocation2 + $0x10] sm:$0xff] 0.0
    %23 = vst [vmem:[#allocation2 + $0x18] sm:$0xff] 0.0
    %24 = vst [vmem:[#allocation2 + $0x20] sm:$0xff] 0.0
    %25 = vst [vmem:[#allocation2 + $0x28] sm:$0xff] 0.0
    %26 = vst [vmem:[#allocation2 + $0x30] sm:$0xff] 0.0
    %27 = vst [vmem:[#allocation2 + $0x38] sm:$0xff] 0.0
    %28 = vst [vmem:[#allocation2 + $0x40] sm:$0xff] 0.0
    %29 = vst [vmem:[#allocation2 + $0x48] sm:$0xff] 0.0
    %30 = vst [vmem:[#allocation2 + $0x50] sm:$0xff] 0.0
    %31 = vst [vmem:[#allocation2 + $0x58] sm:$0xff] 0.0
    %32 = vst [vmem:[#allocation2 + $0x60] sm:$0xff] 0.0
    %33 = vst [vmem:[#allocation2 + $0x68] sm:$0xff] 0.0
    %34 = vst [vmem:[#allocation2 + $0x70] sm:$0xff] 0.0
    %35 = vst [vmem:[#allocation2 + $0x78] sm:$0xff] 0.0
    %36 = vst [vmem:[#allocation2 + $0x80] sm:$0xff] 0.0
    %37 = vst [vmem:[#allocation2 + $0x88] sm:$0xff] 0.0
    %38 = vst [vmem:[#allocation2 + $0x90] sm:$0xff] 0.0
    %39 = vst [vmem:[#allocation2 + $0x98] sm:$0xff] 0.0
    %40 = vst [vmem:[#allocation2 + $0xa0] sm:$0xff] 0.0
    %41 = vst [vmem:[#allocation2 + $0xa8] sm:$0xff] 0.0
    %42 = vst [vmem:[#allocation2 + $0xb0] sm:$0xff] 0.0
    %43 = vst [vmem:[#allocation2 + $0xb8] sm:$0xff] 0.0
    %44 = vst [vmem:[#allocation2 + $0xc0] sm:$0xff] 0.0
    %45 = vst [vmem:[#allocation2 + $0xc8] sm:$0xff] 0.0
    %46 = vst [vmem:[#allocation2 + $0xd0] sm:$0xff] 0.0
    %47 = vst [vmem:[#allocation2 + $0xd8] sm:$0xff] 0.0
    %48 = vst [vmem:[#allocation2 + $0xe0] sm:$0xff] 0.0
    %49 = vst [vmem:[#allocation2 + $0xe8] sm:$0xff] 0.0
    %50 = vst [vmem:[#allocation2 + $0xf0] sm:$0xff] 0.0
    %51 = vst [vmem:[#allocation2 + $0xf8] sm:$0xff] 0.0
  $region17: #{_forward_impl.9} parent=0 // pred_fallthru
    _
  %v52 = vld [vmem:[#allocation2] sm:$0xff]
  %v53 = vld [vmem:[#allocation2 + $0x8] sm:$0xff]
  %v54 = vld [vmem:[#allocation2 + $0x10] sm:$0xff]
  %v55 = vld [vmem:[#allocation2 + $0x18] sm:$0xff]
  %v56 = vld [vmem:[#allocation2 + $0x20] sm:$0xff]
  %v57 = vld [vmem:[#allocation2 + $0x28] sm:$0xff]
  %v58 = vld [vmem:[#allocation2 + $0x30] sm:$0xff]
  %v59 = vld [vmem:[#allocation2 + $0x38] sm:$0xff]
  %v60 = vld [vmem:[#allocation2 + $0x40] sm:$0xff]
  %v61 = vld [vmem:[#allocation2 + $0x48] sm:$0xff]
  %v62 = vld [vmem:[#allocation2 + $0x50] sm:$0xff]
  %v63 = vld [vmem:[#allocation2 + $0x58] sm:$0xff]
  %v64 = vld [vmem:[#allocation2 + $0x60] sm:$0xff]
  %v65 = vld [vmem:[#allocation2 + $0x68] sm:$0xff]
  %v66 = vld [vmem:[#allocation2 + $0x70] sm:$0xff]
  %v67 = vld [vmem:[#allocation2 + $0x78] sm:$0xff]
  %v68 = vld [vmem:[#allocation2 + $0x80] sm:$0xff]
  %v69 = vld [vmem:[#allocation2 + $0x88] sm:$0xff]
  %v70 = vld [vmem:[#allocation2 + $0x90] sm:$0xff]
  %v71 = vld [vmem:[#allocation2 + $0x98] sm:$0xff]
  %v72 = vld [vmem:[#allocation2 + $0xa0] sm:$0xff]
  %v73 = vld [vmem:[#allocation2 + $0xa8] sm:$0xff]
  %v74 = vld [vmem:[#allocation2 + $0xb0] sm:$0xff]
  %v75 = vld [vmem:[#allocation2 + $0xb8] sm:$0xff]
  %v76 = vld [vmem:[#allocation2 + $0xc0] sm:$0xff]
  %v77 = vld [vmem:[#allocation2 + $0xc8] sm:$0xff]
  %v78 = vld [vmem:[#allocation2 + $0xd0] sm:$0xff]
  %v79 = vld [vmem:[#allocation2 + $0xd8] sm:$0xff]
  %v80 = vld [vmem:[#allocation2 + $0xe0] sm:$0xff]
  %v81 = vld [vmem:[#allocation2 + $0xe8] sm:$0xff]
  %v82 = vld [vmem:[#allocation2 + $0xf0] sm:$0xff]
  %v83 = vld [vmem:[#allocation2 + $0xf8] sm:$0xff]
  %v84 = vld [vmem:[%s0] sm:$0xff]
  %v85 = vld [vmem:[%s0 + $0x8] sm:$0xff]
  %v86 = vld [vmem:[%s0 + $0x10] sm:$0xff]
  %v87 = vld [vmem:[%s0 + $0x18] sm:$0xff]
  %v88 = vld [vmem:[%s0 + $0x20] sm:$0xff]
  %v89 = vld [vmem:[%s0 + $0x28] sm:$0xff]
  %v90 = vld [vmem:[%s0 + $0x30] sm:$0xff]
  %v91 = vld [vmem:[%s0 + $0x38] sm:$0xff]
  %v92 = vld [vmem:[%s0 + $0x40] sm:$0xff]
  %v93 = vld [vmem:[%s0 + $0x48] sm:$0xff]
  %v94 = vld [vmem:[%s0 + $0x50] sm:$0xff]
  %v95 = vld [vmem:[%s0 + $0x58] sm:$0xff]
  %v96 = vld [vmem:[%s0 + $0x60] sm:$0xff]
  %v97 = vld [vmem:[%s0 + $0x68] sm:$0xff]
  %v98 = vld [vmem:[%s0 + $0x70] sm:$0xff]
  %v99 = vld [vmem:[%s0 + $0x78] sm:$0xff]
  %v100 = vld [vmem:[%s0 + $0x80] sm:$0xff]
  %v101 = vld [vmem:[%s0 + $0x88] sm:$0xff]
  %v102 = vld [vmem:[%s0 + $0x90] sm:$0xff]
  %v103 = vld [vmem:[%s0 + $0x98] sm:$0xff]
  %v104 = vld [vmem:[%s0 + $0xa0] sm:$0xff]
  %v105 = vld [vmem:[%s0 + $0xa8] sm:$0xff]
  %v106 = vld [vmem:[%s0 + $0xb0] sm:$0xff]
  %v107 = vld [vmem:[%s0 + $0xb8] sm:$0xff]
  %v108 = vld [vmem:[%s0 + $0xc0] sm:$0xff]
  %v109 = vld [vmem:[%s0 + $0xc8] sm:$0xff]
  %v110 = vld [vmem:[%s0 + $0xd0] sm:$0xff]
  %v111 = vld [vmem:[%s0 + $0xd8] sm:$0xff]
  %v112 = vld [vmem:[%s0 + $0xe0] sm:$0xff]
  %v113 = vld [vmem:[%s0 + $0xe8] sm:$0xff]
  %v114 = vld [vmem:[%s0 + $0xf0] sm:$0xff]
  %v115 = vld [vmem:[%s0 + $0xf8] sm:$0xff]
  %v116 = vld [vmem:[%s1] sm:$0xf]
  %v117 = vld [vmem:[%s1 + $0x4] sm:$0xf]
  %v118 = vld [vmem:[%s1 + $0x8] sm:$0xf]
  %v119 = vld [vmem:[%s1 + $0xc] sm:$0xf]
  %v120 = vld [vmem:[%s1 + $0x10] sm:$0xf]
  %v121 = vld [vmem:[%s1 + $0x14] sm:$0xf]
  %v122 = vld [vmem:[%s1 + $0x18] sm:$0xf]
  %v123 = vld [vmem:[%s1 + $0x1c] sm:$0xf]
  %v124 = vld [vmem:[%s1 + $0x20] sm:$0xf]
  %v125 = vld [vmem:[%s1 + $0x24] sm:$0xf]
  %v126 = vld [vmem:[%s1 + $0x28] sm:$0xf]
  %v127 = vld [vmem:[%s1 + $0x2c] sm:$0xf]
  %v128 = vld [vmem:[%s1 + $0x30] sm:$0xf]
  %v129 = vld [vmem:[%s1 + $0x34] sm:$0xf]
  %v130 = vld [vmem:[%s1 + $0x38] sm:$0xf]
  %v131 = vld [vmem:[%s1 + $0x3c] sm:$0xf]
  %v132 = vld [vmem:[%s1 + $0x40] sm:$0xf]
  %v133 = vld [vmem:[%s1 + $0x44] sm:$0xf]
  %v134 = vld [vmem:[%s1 + $0x48] sm:$0xf]
  %v135 = vld [vmem:[%s1 + $0x4c] sm:$0xf]
  %v136 = vld [vmem:[%s1 + $0x50] sm:$0xf]
  %v137 = vld [vmem:[%s1 + $0x54] sm:$0xf]
  %v138 = vld [vmem:[%s1 + $0x58] sm:$0xf]
  %v139 = vld [vmem:[%s1 + $0x5c] sm:$0xf]
  %v140 = vld [vmem:[%s1 + $0x60] sm:$0xf]
  %v141 = vld [vmem:[%s1 + $0x64] sm:$0xf]
  %v142 = vld [vmem:[%s1 + $0x68] sm:$0xf]
  %v143 = vld [vmem:[%s1 + $0x6c] sm:$0xf]
  %v144 = vld [vmem:[%s1 + $0x70] sm:$0xf]
  %v145 = vld [vmem:[%s1 + $0x74] sm:$0xf]
  %v146 = vld [vmem:[%s1 + $0x78] sm:$0xf]
  %v147 = vld [vmem:[%s1 + $0x7c] sm:$0xf]
  %v180 = vunpack.c.l.b16 %v84
  %v181 = vunpack.c.h.b16 %v84
  %v182 = vunpack.c.l.b16 %v85
  %v183 = vunpack.c.h.b16 %v85
  %v184 = vunpack.c.l.b16 %v86
  %v185 = vunpack.c.h.b16 %v86
  %v186 = vunpack.c.l.b16 %v87
  %v187 = vunpack.c.h.b16 %v87
  %v188 = vunpack.c.l.b16 %v88
  %v189 = vunpack.c.h.b16 %v88
  %v190 = vunpack.c.l.b16 %v89
  %v191 = vunpack.c.h.b16 %v89
  %v192 = vunpack.c.l.b16 %v90
  %v193 = vunpack.c.h.b16 %v90
  %v194 = vunpack.c.l.b16 %v91
  %v195 = vunpack.c.h.b16 %v91
  %v196 = vunpack.c.l.b16 %v92
  %v197 = vunpack.c.h.b16 %v92
  %v198 = vunpack.c.l.b16 %v93
  %v199 = vunpack.c.h.b16 %v93
  %v200 = vunpack.c.l.b16 %v94
  %v201 = vunpack.c.h.b16 %v94
  %v202 = vunpack.c.l.b16 %v95
  %v203 = vunpack.c.h.b16 %v95
  %v204 = vunpack.c.l.b16 %v96
  %v205 = vunpack.c.h.b16 %v96
  %v206 = vunpack.c.l.b16 %v97
  %v207 = vunpack.c.h.b16 %v97
  %v208 = vunpack.c.l.b16 %v98
  %v209 = vunpack.c.h.b16 %v98
  %v210 = vunpack.c.l.b16 %v99
  %v211 = vunpack.c.h.b16 %v99
  %v212 = vunpack.c.l.b16 %v100
  %v213 = vunpack.c.h.b16 %v100
  %v214 = vunpack.c.l.b16 %v101
  %v215 = vunpack.c.h.b16 %v101
  %v216 = vunpack.c.l.b16 %v102
  %v217 = vunpack.c.h.b16 %v102
  %v218 = vunpack.c.l.b16 %v103
  %v219 = vunpack.c.h.b16 %v103
  %v220 = vunpack.c.l.b16 %v104
  %v221 = vunpack.c.h.b16 %v104
  %v222 = vunpack.c.l.b16 %v105
  %v223 = vunpack.c.h.b16 %v105
  %v224 = vunpack.c.l.b16 %v106
  %v225 = vunpack.c.h.b16 %v106
  %v226 = vunpack.c.l.b16 %v107
  %v227 = vunpack.c.h.b16 %v107
  %v228 = vunpack.c.l.b16 %v108
  %v229 = vunpack.c.h.b16 %v108
  %v230 = vunpack.c.l.b16 %v109
  %v231 = vunpack.c.h.b16 %v109
  %v232 = vunpack.c.l.b16 %v110
  %v233 = vunpack.c.h.b16 %v110
  %v234 = vunpack.c.l.b16 %v111
  %v235 = vunpack.c.h.b16 %v111
  %v236 = vunpack.c.l.b16 %v112
  %v237 = vunpack.c.h.b16 %v112
  %v238 = vunpack.c.l.b16 %v113
  %v239 = vunpack.c.h.b16 %v113
  %v240 = vunpack.c.l.b16 %v114
  %v241 = vunpack.c.h.b16 %v114
  %v242 = vunpack.c.l.b16 %v115
  %v243 = vunpack.c.h.b16 %v115
  %v244 = vpack.c.b16 %v182, %v180
  %v245 = vpack.c.b16 %v183, %v181
  %v246 = vpack.c.b16 %v186, %v184
  %v247 = vpack.c.b16 %v187, %v185
  %v248 = vpack.c.b16 %v190, %v188
  %v249 = vpack.c.b16 %v191, %v189
  %v250 = vpack.c.b16 %v194, %v192
  %v251 = vpack.c.b16 %v195, %v193
  %v252 = vpack.c.b16 %v198, %v196
  %v253 = vpack.c.b16 %v199, %v197
  %v254 = vpack.c.b16 %v202, %v200
  %v255 = vpack.c.b16 %v203, %v201
  %v256 = vpack.c.b16 %v206, %v204
  %v257 = vpack.c.b16 %v207, %v205
  %v258 = vpack.c.b16 %v210, %v208
  %v259 = vpack.c.b16 %v211, %v209
  %v260 = vpack.c.b16 %v214, %v212
  %v261 = vpack.c.b16 %v215, %v213
  %v262 = vpack.c.b16 %v218, %v216
  %v263 = vpack.c.b16 %v219, %v217
  %v264 = vpack.c.b16 %v222, %v220
  %v265 = vpack.c.b16 %v223, %v221
  %v266 = vpack.c.b16 %v226, %v224
  %v267 = vpack.c.b16 %v227, %v225
  %v268 = vpack.c.b16 %v230, %v228
  %v269 = vpack.c.b16 %v231, %v229
  %v270 = vpack.c.b16 %v234, %v232
  %v271 = vpack.c.b16 %v235, %v233
  %v272 = vpack.c.b16 %v238, %v236
  %v273 = vpack.c.b16 %v239, %v237
  %v274 = vpack.c.b16 %v242, %v240
  %v275 = vpack.c.b16 %v243, %v241
  %v340 = vunpack.c.l.b16 %v116
  %v341 = vunpack.c.l.b16 %v117
  %v342 = vunpack.c.l.b16 %v118
  %v343 = vunpack.c.l.b16 %v119
  %v344 = vunpack.c.l.b16 %v120
  %v345 = vunpack.c.l.b16 %v121
  %v346 = vunpack.c.l.b16 %v122
  %v347 = vunpack.c.l.b16 %v123
  %v348 = vunpack.c.l.b16 %v124
  %v349 = vunpack.c.l.b16 %v125
  %v350 = vunpack.c.l.b16 %v126
  %v351 = vunpack.c.l.b16 %v127
  %v352 = vunpack.c.l.b16 %v128
  %v353 = vunpack.c.l.b16 %v129
  %v354 = vunpack.c.l.b16 %v130
  %v355 = vunpack.c.l.b16 %v131
  %v356 = vunpack.c.l.b16 %v132
  %v357 = vunpack.c.l.b16 %v133
  %v358 = vunpack.c.l.b16 %v134
  %v359 = vunpack.c.l.b16 %v135
  %v360 = vunpack.c.l.b16 %v136
  %v361 = vunpack.c.l.b16 %v137
  %v362 = vunpack.c.l.b16 %v138
  %v363 = vunpack.c.l.b16 %v139
  %v364 = vunpack.c.l.b16 %v140
  %v365 = vunpack.c.l.b16 %v141
  %v366 = vunpack.c.l.b16 %v142
  %v367 = vunpack.c.l.b16 %v143
  %v368 = vunpack.c.l.b16 %v144
  %v369 = vunpack.c.l.b16 %v145
  %v370 = vunpack.c.l.b16 %v146
  %v371 = vunpack.c.l.b16 %v147
  %v372 = vpack.c.b16 %v341, %v340
  %v373 = vpack.c.b16 %v343, %v342
  %v374 = vpack.c.b16 %v345, %v344
  %v375 = vpack.c.b16 %v347, %v346
  %v376 = vpack.c.b16 %v349, %v348
  %v377 = vpack.c.b16 %v351, %v350
  %v378 = vpack.c.b16 %v353, %v352
  %v379 = vpack.c.b16 %v355, %v354
  %v380 = vpack.c.b16 %v357, %v356
  %v381 = vpack.c.b16 %v359, %v358
  %v382 = vpack.c.b16 %v361, %v360
  %v383 = vpack.c.b16 %v363, %v362
  %v384 = vpack.c.b16 %v365, %v364
  %v385 = vpack.c.b16 %v367, %v366
  %v386 = vpack.c.b16 %v369, %v368
  %v387 = vpack.c.b16 %v371, %v370
  %404 = vmatpush.bf16.msra.mxu0 %v379
  %405 = vmatpush.bf16.msra.mxu0 %v378
  %406 = vmatpush.bf16.msra.mxu0 %v377
  %407 = vmatpush.bf16.msra.mxu0 %v376
  %408 = vmatpush.bf16.msra.mxu0 %v375
  %409 = vmatpush.bf16.msra.mxu0 %v374
  %410 = vmatpush.bf16.msra.mxu0 %v373
  %411 = vmatpush.bf16.msra.mxu0 %v372
  %412 = vmatmul.bf16.gmra.mxu0 %v244
  %v413 = vpop.f32.mrf.mxu0
  %v414 = vadd.f32 0.0, %v413
  %v415 = vpop.f32.mrf.mxu0
  %v416 = vadd.f32 0.0, %v415
  %417 = vmatmul.bf16.gmra.mxu0 %v246
  %v418 = vpop.f32.mrf.mxu0
  %v419 = vadd.f32 0.0, %v418
  %v420 = vpop.f32.mrf.mxu0
  %v421 = vadd.f32 0.0, %v420
  %422 = vmatmul.bf16.gmra.mxu0 %v248
  %v423 = vpop.f32.mrf.mxu0
  %v424 = vadd.f32 0.0, %v423
  %v425 = vpop.f32.mrf.mxu0
  %v426 = vadd.f32 0.0, %v425
  %427 = vmatmul.bf16.gmra.mxu0 %v250
  %v428 = vpop.f32.mrf.mxu0
  %v429 = vadd.f32 0.0, %v428
  %v430 = vpop.f32.mrf.mxu0
  %v431 = vadd.f32 0.0, %v430
  %432 = vmatmul.bf16.gmra.mxu0 %v252
  %v433 = vpop.f32.mrf.mxu0
  %v434 = vadd.f32 0.0, %v433
  %v435 = vpop.f32.mrf.mxu0
  %v436 = vadd.f32 0.0, %v435
  %437 = vmatmul.bf16.gmra.mxu0 %v254
  %v438 = vpop.f32.mrf.mxu0
  %v439 = vadd.f32 0.0, %v438
  %v440 = vpop.f32.mrf.mxu0
  %v441 = vadd.f32 0.0, %v440
  %442 = vmatmul.bf16.gmra.mxu0 %v256
  %v443 = vpop.f32.mrf.mxu0
  %v444 = vadd.f32 0.0, %v443
  %v445 = vpop.f32.mrf.mxu0
  %v446 = vadd.f32 0.0, %v445
  %447 = vmatmul.bf16.gmra.mxu0 %v258
  %v448 = vpop.f32.mrf.mxu0
  %v449 = vadd.f32 0.0, %v448
  %v450 = vpop.f32.mrf.mxu0
  %v451 = vadd.f32 0.0, %v450
  %452 = vmatmul.bf16.gmra.mxu0 %v260
  %v453 = vpop.f32.mrf.mxu0
  %v454 = vadd.f32 0.0, %v453
  %v455 = vpop.f32.mrf.mxu0
  %v456 = vadd.f32 0.0, %v455
  %457 = vmatmul.bf16.gmra.mxu0 %v262
  %v458 = vpop.f32.mrf.mxu0
  %v459 = vadd.f32 0.0, %v458
  %v460 = vpop.f32.mrf.mxu0
  %v461 = vadd.f32 0.0, %v460
  %462 = vmatmul.bf16.gmra.mxu0 %v264
  %v463 = vpop.f32.mrf.mxu0
  %v464 = vadd.f32 0.0, %v463
  %v465 = vpop.f32.mrf.mxu0
  %v466 = vadd.f32 0.0, %v465
  %467 = vmatmul.bf16.gmra.mxu0 %v266
  %v468 = vpop.f32.mrf.mxu0
  %v469 = vadd.f32 0.0, %v468
  %v470 = vpop.f32.mrf.mxu0
  %v471 = vadd.f32 0.0, %v470
  %472 = vmatmul.bf16.gmra.mxu0 %v268
  %v473 = vpop.f32.mrf.mxu0
  %v474 = vadd.f32 0.0, %v473
  %v475 = vpop.f32.mrf.mxu0
  %v476 = vadd.f32 0.0, %v475
  %477 = vmatmul.bf16.gmra.mxu0 %v270
  %v478 = vpop.f32.mrf.mxu0
  %v479 = vadd.f32 0.0, %v478
  %v480 = vpop.f32.mrf.mxu0
  %v481 = vadd.f32 0.0, %v480
  %482 = vmatmul.bf16.gmra.mxu0 %v272
  %v483 = vpop.f32.mrf.mxu0
  %v484 = vadd.f32 0.0, %v483
  %v485 = vpop.f32.mrf.mxu0
  %v486 = vadd.f32 0.0, %v485
  %487 = vmatmul.bf16.gmra.mxu0 %v274
  %v488 = vpop.f32.mrf.mxu0
  %v489 = vadd.f32 0.0, %v488
  %v490 = vpop.f32.mrf.mxu0
  %v491 = vadd.f32 0.0, %v490
  %492 = vdwg.mxu0
  %493 = vmatpush.bf16.msra.mxu0 %v387
  %494 = vmatpush.bf16.msra.mxu0 %v386
  %495 = vmatpush.bf16.msra.mxu0 %v385
  %496 = vmatpush.bf16.msra.mxu0 %v384
  %497 = vmatpush.bf16.msra.mxu0 %v383
  %498 = vmatpush.bf16.msra.mxu0 %v382
  %499 = vmatpush.bf16.msra.mxu0 %v381
  %500 = vmatpush.bf16.msra.mxu0 %v380
  %501 = vmatmul.bf16.gmra.mxu0 %v245
  %v502 = vpop.f32.mrf.mxu0
  %v503 = vadd.f32 %v414, %v502
  %v504 = vpop.f32.mrf.mxu0
  %v505 = vadd.f32 %v416, %v504
  %506 = vmatmul.bf16.gmra.mxu0 %v247
  %v507 = vpop.f32.mrf.mxu0
  %v508 = vadd.f32 %v419, %v507
  %v509 = vpop.f32.mrf.mxu0
  %v510 = vadd.f32 %v421, %v509
  %511 = vmatmul.bf16.gmra.mxu0 %v249
  %v512 = vpop.f32.mrf.mxu0
  %v513 = vadd.f32 %v424, %v512
  %v514 = vpop.f32.mrf.mxu0
  %v515 = vadd.f32 %v426, %v514
  %516 = vmatmul.bf16.gmra.mxu0 %v251
  %v517 = vpop.f32.mrf.mxu0
  %v518 = vadd.f32 %v429, %v517
  %v519 = vpop.f32.mrf.mxu0
  %v520 = vadd.f32 %v431, %v519
  %521 = vmatmul.bf16.gmra.mxu0 %v253
  %v522 = vpop.f32.mrf.mxu0
  %v523 = vadd.f32 %v434, %v522
  %v524 = vpop.f32.mrf.mxu0
  %v525 = vadd.f32 %v436, %v524
  %526 = vmatmul.bf16.gmra.mxu0 %v255
  %v527 = vpop.f32.mrf.mxu0
  %v528 = vadd.f32 %v439, %v527
  %v529 = vpop.f32.mrf.mxu0
  %v530 = vadd.f32 %v441, %v529
  %531 = vmatmul.bf16.gmra.mxu0 %v257
  %v532 = vpop.f32.mrf.mxu0
  %v533 = vadd.f32 %v444, %v532
  %v534 = vpop.f32.mrf.mxu0
  %v535 = vadd.f32 %v446, %v534
  %536 = vmatmul.bf16.gmra.mxu0 %v259
  %v537 = vpop.f32.mrf.mxu0
  %v538 = vadd.f32 %v449, %v537
  %v539 = vpop.f32.mrf.mxu0
  %v540 = vadd.f32 %v451, %v539
  %541 = vmatmul.bf16.gmra.mxu0 %v261
  %v542 = vpop.f32.mrf.mxu0
  %v543 = vadd.f32 %v454, %v542
  %v544 = vpop.f32.mrf.mxu0
  %v545 = vadd.f32 %v456, %v544
  %546 = vmatmul.bf16.gmra.mxu0 %v263
  %v547 = vpop.f32.mrf.mxu0
  %v548 = vadd.f32 %v459, %v547
  %v549 = vpop.f32.mrf.mxu0
  %v550 = vadd.f32 %v461, %v549
  %551 = vmatmul.bf16.gmra.mxu0 %v265
  %v552 = vpop.f32.mrf.mxu0
  %v553 = vadd.f32 %v464, %v552
  %v554 = vpop.f32.mrf.mxu0
  %v555 = vadd.f32 %v466, %v554
  %556 = vmatmul.bf16.gmra.mxu0 %v267
  %v557 = vpop.f32.mrf.mxu0
  %v558 = vadd.f32 %v469, %v557
  %v559 = vpop.f32.mrf.mxu0
  %v560 = vadd.f32 %v471, %v559
  %561 = vmatmul.bf16.gmra.mxu0 %v269
  %v562 = vpop.f32.mrf.mxu0
  %v563 = vadd.f32 %v474, %v562
  %v564 = vpop.f32.mrf.mxu0
  %v565 = vadd.f32 %v476, %v564
  %566 = vmatmul.bf16.gmra.mxu0 %v271
  %v567 = vpop.f32.mrf.mxu0
  %v568 = vadd.f32 %v479, %v567
  %v569 = vpop.f32.mrf.mxu0
  %v570 = vadd.f32 %v481, %v569
  %571 = vmatmul.bf16.gmra.mxu0 %v273
  %v572 = vpop.f32.mrf.mxu0
  %v573 = vadd.f32 %v484, %v572
  %v574 = vpop.f32.mrf.mxu0
  %v575 = vadd.f32 %v486, %v574
  %576 = vmatmul.bf16.gmra.mxu0 %v275
  %v577 = vpop.f32.mrf.mxu0
  %v578 = vadd.f32 %v489, %v577
  %v579 = vpop.f32.mrf.mxu0
  %v580 = vadd.f32 %v491, %v579
  %581 = vdwg.mxu0
  %v582 = vadd.f32 %v52, %v503
  %v583 = vadd.f32 %v53, %v505
  %v584 = vadd.f32 %v54, %v508
  %v585 = vadd.f32 %v55, %v510
  %v586 = vadd.f32 %v56, %v513
  %v587 = vadd.f32 %v57, %v515
  %v588 = vadd.f32 %v58, %v518
  %v589 = vadd.f32 %v59, %v520
  %v590 = vadd.f32 %v60, %v523
  %v591 = vadd.f32 %v61, %v525
  %v592 = vadd.f32 %v62, %v528
  %v593 = vadd.f32 %v63, %v530
  %v594 = vadd.f32 %v64, %v533
  %v595 = vadd.f32 %v65, %v535
  %v596 = vadd.f32 %v66, %v538
  %v597 = vadd.f32 %v67, %v540
  %v598 = vadd.f32 %v68, %v543
  %v599 = vadd.f32 %v69, %v545
  %v600 = vadd.f32 %v70, %v548
  %v601 = vadd.f32 %v71, %v550
  %v602 = vadd.f32 %v72, %v553
  %v603 = vadd.f32 %v73, %v555
  %v604 = vadd.f32 %v74, %v558
  %v605 = vadd.f32 %v75, %v560
  %v606 = vadd.f32 %v76, %v563
  %v607 = vadd.f32 %v77, %v565
  %v608 = vadd.f32 %v78, %v568
  %v609 = vadd.f32 %v79, %v570
  %v610 = vadd.f32 %v80, %v573
  %v611 = vadd.f32 %v81, %v575
  %v612 = vadd.f32 %v82, %v578
  %v613 = vadd.f32 %v83, %v580
  %614 = vst [vmem:[#allocation2] sm:$0xff] %v582
  %615 = vst [vmem:[#allocation2 + $0x8] sm:$0xff] %v583
  %616 = vst [vmem:[#allocation2 + $0x10] sm:$0xff] %v584
  %617 = vst [vmem:[#allocation2 + $0x18] sm:$0xff] %v585
  %618 = vst [vmem:[#allocation2 + $0x20] sm:$0xff] %v586
  %619 = vst [vmem:[#allocation2 + $0x28] sm:$0xff] %v587
  %620 = vst [vmem:[#allocation2 + $0x30] sm:$0xff] %v588
  %621 = vst [vmem:[#allocation2 + $0x38] sm:$0xff] %v589
  %622 = vst [vmem:[#allocation2 + $0x40] sm:$0xff] %v590
  %623 = vst [vmem:[#allocation2 + $0x48] sm:$0xff] %v591
  %624 = vst [vmem:[#allocation2 + $0x50] sm:$0xff] %v592
  %625 = vst [vmem:[#allocation2 + $0x58] sm:$0xff] %v593
  %626 = vst [vmem:[#allocation2 + $0x60] sm:$0xff] %v594
  %627 = vst [vmem:[#allocation2 + $0x68] sm:$0xff] %v595
  %628 = vst [vmem:[#allocation2 + $0x70] sm:$0xff] %v596
  %629 = vst [vmem:[#allocation2 + $0x78] sm:$0xff] %v597
  %630 = vst [vmem:[#allocation2 + $0x80] sm:$0xff] %v598
  %631 = vst [vmem:[#allocation2 + $0x88] sm:$0xff] %v599
  %632 = vst [vmem:[#allocation2 + $0x90] sm:$0xff] %v600
  %633 = vst [vmem:[#allocation2 + $0x98] sm:$0xff] %v601
  %634 = vst [vmem:[#allocation2 + $0xa0] sm:$0xff] %v602
  %635 = vst [vmem:[#allocation2 + $0xa8] sm:$0xff] %v603
  %636 = vst [vmem:[#allocation2 + $0xb0] sm:$0xff] %v604
  %637 = vst [vmem:[#allocation2 + $0xb8] sm:$0xff] %v605
  %638 = vst [vmem:[#allocation2 + $0xc0] sm:$0xff] %v606
  %639 = vst [vmem:[#allocation2 + $0xc8] sm:$0xff] %v607
  %640 = vst [vmem:[#allocation2 + $0xd0] sm:$0xff] %v608
  %641 = vst [vmem:[#allocation2 + $0xd8] sm:$0xff] %v609
  %642 = vst [vmem:[#allocation2 + $0xe0] sm:$0xff] %v610
  %643 = vst [vmem:[#allocation2 + $0xe8] sm:$0xff] %v611
  %644 = vst [vmem:[#allocation2 + $0xf0] sm:$0xff] %v612
  %645 = vst [vmem:[#allocation2 + $0xf8] sm:$0xff] %v613
  // Predicated region
  $region18: #{_forward_impl.9} parent=0 // pred_check
    %p646 = pneg %p16
  $region19: #{_forward_impl.9} parent=0 // pred_check_branch
    %648 = sbr.rel (%p646) target = $region21
  $region20: #{_forward_impl.9} parent=0 // pred_region
    %v649 = vld [vmem:[#allocation2] sm:$0xff]
    %v650 = vld [vmem:[#allocation2 + $0x8] sm:$0xff]
    %v651 = vld [vmem:[#allocation2 + $0x10] sm:$0xff]
    %v652 = vld [vmem:[#allocation2 + $0x18] sm:$0xff]
    %v653 = vld [vmem:[#allocation2 + $0x20] sm:$0xff]
    %v654 = vld [vmem:[#allocation2 + $0x28] sm:$0xff]
    %v655 = vld [vmem:[#allocation2 + $0x30] sm:$0xff]
    %v656 = vld [vmem:[#allocation2 + $0x38] sm:$0xff]
    %v657 = vld [vmem:[#allocation2 + $0x40] sm:$0xff]
    %v658 = vld [vmem:[#allocation2 + $0x48] sm:$0xff]
    %v659 = vld [vmem:[#allocation2 + $0x50] sm:$0xff]
    %v660 = vld [vmem:[#allocation2 + $0x58] sm:$0xff]
    %v661 = vld [vmem:[#allocation2 + $0x60] sm:$0xff]
    %v662 = vld [vmem:[#allocation2 + $0x68] sm:$0xff]
    %v663 = vld [vmem:[#allocation2 + $0x70] sm:$0xff]
    %v664 = vld [vmem:[#allocation2 + $0x78] sm:$0xff]
    %v665 = vld [vmem:[#allocation2 + $0x80] sm:$0xff]
    %v666 = vld [vmem:[#allocation2 + $0x88] sm:$0xff]
    %v667 = vld [vmem:[#allocation2 + $0x90] sm:$0xff]
    %v668 = vld [vmem:[#allocation2 + $0x98] sm:$0xff]
    %v669 = vld [vmem:[#allocation2 + $0xa0] sm:$0xff]
    %v670 = vld [vmem:[#allocation2 + $0xa8] sm:$0xff]
    %v671 = vld [vmem:[#allocation2 + $0xb0] sm:$0xff]
    %v672 = vld [vmem:[#allocation2 + $0xb8] sm:$0xff]
    %v673 = vld [vmem:[#allocation2 + $0xc0] sm:$0xff]
    %v674 = vld [vmem:[#allocation2 + $0xc8] sm:$0xff]
    %v675 = vld [vmem:[#allocation2 + $0xd0] sm:$0xff]
    %v676 = vld [vmem:[#allocation2 + $0xd8] sm:$0xff]
    %v677 = vld [vmem:[#allocation2 + $0xe0] sm:$0xff]
    %v678 = vld [vmem:[#allocation2 + $0xe8] sm:$0xff]
    %v679 = vld [vmem:[#allocation2 + $0xf0] sm:$0xff]
    %v680 = vld [vmem:[#allocation2 + $0xf8] sm:$0xff]
    %v681 = vpack.c.bf16 %v649, %v649
    %v682 = vpack.c.bf16 %v650, %v650
    %v683 = vpack.c.bf16 %v651, %v651
    %v684 = vpack.c.bf16 %v652, %v652
    %v685 = vpack.c.bf16 %v653, %v653
    %v686 = vpack.c.bf16 %v654, %v654
    %v687 = vpack.c.bf16 %v655, %v655
    %v688 = vpack.c.bf16 %v656, %v656
    %v689 = vpack.c.bf16 %v657, %v657
    %v690 = vpack.c.bf16 %v658, %v658
    %v691 = vpack.c.bf16 %v659, %v659
    %v692 = vpack.c.bf16 %v660, %v660
    %v693 = vpack.c.bf16 %v661, %v661
    %v694 = vpack.c.bf16 %v662, %v662
    %v695 = vpack.c.bf16 %v663, %v663
    %v696 = vpack.c.bf16 %v664, %v664
    %v697 = vpack.c.bf16 %v665, %v665
    %v698 = vpack.c.bf16 %v666, %v666
    %v699 = vpack.c.bf16 %v667, %v667
    %v700 = vpack.c.bf16 %v668, %v668
    %v701 = vpack.c.bf16 %v669, %v669
    %v702 = vpack.c.bf16 %v670, %v670
    %v703 = vpack.c.bf16 %v671, %v671
    %v704 = vpack.c.bf16 %v672, %v672
    %v705 = vpack.c.bf16 %v673, %v673
    %v706 = vpack.c.bf16 %v674, %v674
    %v707 = vpack.c.bf16 %v675, %v675
    %v708 = vpack.c.bf16 %v676, %v676
    %v709 = vpack.c.bf16 %v677, %v677
    %v710 = vpack.c.bf16 %v678, %v678
    %v711 = vpack.c.bf16 %v679, %v679
    %v712 = vpack.c.bf16 %v680, %v680
    %713 = vst [vmem:[%s3] sm:$0xf] %v681
    %714 = vst [vmem:[%s3 + $0x4] sm:$0xf] %v682
    %715 = vst [vmem:[%s3 + $0x8] sm:$0xf] %v683
    %716 = vst [vmem:[%s3 + $0xc] sm:$0xf] %v684
    %717 = vst [vmem:[%s3 + $0x10] sm:$0xf] %v685
    %718 = vst [vmem:[%s3 + $0x14] sm:$0xf] %v686
    %719 = vst [vmem:[%s3 + $0x18] sm:$0xf] %v687
    %720 = vst [vmem:[%s3 + $0x1c] sm:$0xf] %v688
    %721 = vst [vmem:[%s3 + $0x20] sm:$0xf] %v689
    %722 = vst [vmem:[%s3 + $0x24] sm:$0xf] %v690
    %723 = vst [vmem:[%s3 + $0x28] sm:$0xf] %v691
    %724 = vst [vmem:[%s3 + $0x2c] sm:$0xf] %v692
    %725 = vst [vmem:[%s3 + $0x30] sm:$0xf] %v693
    %726 = vst [vmem:[%s3 + $0x34] sm:$0xf] %v694
    %727 = vst [vmem:[%s3 + $0x38] sm:$0xf] %v695
    %728 = vst [vmem:[%s3 + $0x3c] sm:$0xf] %v696
    %729 = vst [vmem:[%s3 + $0x40] sm:$0xf] %v697
    %730 = vst [vmem:[%s3 + $0x44] sm:$0xf] %v698
    %731 = vst [vmem:[%s3 + $0x48] sm:$0xf] %v699
    %732 = vst [vmem:[%s3 + $0x4c] sm:$0xf] %v700
    %733 = vst [vmem:[%s3 + $0x50] sm:$0xf] %v701
    %734 = vst [vmem:[%s3 + $0x54] sm:$0xf] %v702
    %735 = vst [vmem:[%s3 + $0x58] sm:$0xf] %v703
    %736 = vst [vmem:[%s3 + $0x5c] sm:$0xf] %v704
    %737 = vst [vmem:[%s3 + $0x60] sm:$0xf] %v705
    %738 = vst [vmem:[%s3 + $0x64] sm:$0xf] %v706
    %739 = vst [vmem:[%s3 + $0x68] sm:$0xf] %v707
    %740 = vst [vmem:[%s3 + $0x6c] sm:$0xf] %v708
    %741 = vst [vmem:[%s3 + $0x70] sm:$0xf] %v709
    %742 = vst [vmem:[%s3 + $0x74] sm:$0xf] %v710
    %743 = vst [vmem:[%s3 + $0x78] sm:$0xf] %v711
    %744 = vst [vmem:[%s3 + $0x7c] sm:$0xf] %v712
    %v745 = vld [vmem:[%s2] sm:$0xff]
    %v746 = vld [vmem:[%s2 + $0x8] sm:$0xff]
    %v747 = vld [vmem:[%s2 + $0x10] sm:$0xff]
    %v748 = vld [vmem:[%s2 + $0x18] sm:$0xff]
    %v749 = vld [vmem:[%s2 + $0x20] sm:$0xff]
    %v750 = vld [vmem:[%s2 + $0x28] sm:$0xff]
    %v751 = vld [vmem:[%s2 + $0x30] sm:$0xff]
    %v752 = vld [vmem:[%s2 + $0x38] sm:$0xff]
    %v753 = vld [vmem:[%s2 + $0x40] sm:$0xff]
    %v754 = vld [vmem:[%s2 + $0x48] sm:$0xff]
    %v755 = vld [vmem:[%s2 + $0x50] sm:$0xff]
    %v756 = vld [vmem:[%s2 + $0x58] sm:$0xff]
    %v757 = vld [vmem:[%s2 + $0x60] sm:$0xff]
    %v758 = vld [vmem:[%s2 + $0x68] sm:$0xff]
    %v759 = vld [vmem:[%s2 + $0x70] sm:$0xff]
    %v760 = vld [vmem:[%s2 + $0x78] sm:$0xff]
    %v761 = vld [vmem:[%s2 + $0x80] sm:$0xff]
    %v762 = vld [vmem:[%s2 + $0x88] sm:$0xff]
    %v763 = vld [vmem:[%s2 + $0x90] sm:$0xff]
    %v764 = vld [vmem:[%s2 + $0x98] sm:$0xff]
    %v765 = vld [vmem:[%s2 + $0xa0] sm:$0xff]
    %v766 = vld [vmem:[%s2 + $0xa8] sm:$0xff]
    %v767 = vld [vmem:[%s2 + $0xb0] sm:$0xff]
    %v768 = vld [vmem:[%s2 + $0xb8] sm:$0xff]
    %v769 = vld [vmem:[%s2 + $0xc0] sm:$0xff]
    %v770 = vld [vmem:[%s2 + $0xc8] sm:$0xff]
    %v771 = vld [vmem:[%s2 + $0xd0] sm:$0xff]
    %v772 = vld [vmem:[%s2 + $0xd8] sm:$0xff]
    %v773 = vld [vmem:[%s2 + $0xe0] sm:$0xff]
    %v774 = vld [vmem:[%s2 + $0xe8] sm:$0xff]
    %v775 = vld [vmem:[%s2 + $0xf0] sm:$0xff]
    %v776 = vld [vmem:[%s2 + $0xf8] sm:$0xff]
    %v777 = vld [vmem:[#allocation2] sm:$0xff]
    %v778 = vld [vmem:[#allocation2 + $0x8] sm:$0xff]
    %v779 = vld [vmem:[#allocation2 + $0x10] sm:$0xff]
    %v780 = vld [vmem:[#allocation2 + $0x18] sm:$0xff]
    %v781 = vld [vmem:[#allocation2 + $0x20] sm:$0xff]
    %v782 = vld [vmem:[#allocation2 + $0x28] sm:$0xff]
    %v783 = vld [vmem:[#allocation2 + $0x30] sm:$0xff]
    %v784 = vld [vmem:[#allocation2 + $0x38] sm:$0xff]
    %v785 = vld [vmem:[#allocation2 + $0x40] sm:$0xff]
    %v786 = vld [vmem:[#allocation2 + $0x48] sm:$0xff]
    %v787 = vld [vmem:[#allocation2 + $0x50] sm:$0xff]
    %v788 = vld [vmem:[#allocation2 + $0x58] sm:$0xff]
    %v789 = vld [vmem:[#allocation2 + $0x60] sm:$0xff]
    %v790 = vld [vmem:[#allocation2 + $0x68] sm:$0xff]
    %v791 = vld [vmem:[#allocation2 + $0x70] sm:$0xff]
    %v792 = vld [vmem:[#allocation2 + $0x78] sm:$0xff]
    %v793 = vld [vmem:[#allocation2 + $0x80] sm:$0xff]
    %v794 = vld [vmem:[#allocation2 + $0x88] sm:$0xff]
    %v795 = vld [vmem:[#allocation2 + $0x90] sm:$0xff]
    %v796 = vld [vmem:[#allocation2 + $0x98] sm:$0xff]
    %v797 = vld [vmem:[#allocation2 + $0xa0] sm:$0xff]
    %v798 = vld [vmem:[#allocation2 + $0xa8] sm:$0xff]
    %v799 = vld [vmem:[#allocation2 + $0xb0] sm:$0xff]
    %v800 = vld [vmem:[#allocation2 + $0xb8] sm:$0xff]
    %v801 = vld [vmem:[#allocation2 + $0xc0] sm:$0xff]
    %v802 = vld [vmem:[#allocation2 + $0xc8] sm:$0xff]
    %v803 = vld [vmem:[#allocation2 + $0xd0] sm:$0xff]
    %v804 = vld [vmem:[#allocation2 + $0xd8] sm:$0xff]
    %v805 = vld [vmem:[#allocation2 + $0xe0] sm:$0xff]
    %v806 = vld [vmem:[#allocation2 + $0xe8] sm:$0xff]
    %v807 = vld [vmem:[#allocation2 + $0xf0] sm:$0xff]
    %v808 = vld [vmem:[#allocation2 + $0xf8] sm:$0xff]
    %v809 = vadd.f32 %v745, %v777
    %v810 = vadd.f32 %v746, %v778
    %v811 = vadd.f32 %v747, %v779
    %v812 = vadd.f32 %v748, %v780
    %v813 = vadd.f32 %v749, %v781
    %v814 = vadd.f32 %v750, %v782
    %v815 = vadd.f32 %v751, %v783
    %v816 = vadd.f32 %v752, %v784
    %v817 = vadd.f32 %v753, %v785
    %v818 = vadd.f32 %v754, %v786
    %v819 = vadd.f32 %v755, %v787
    %v820 = vadd.f32 %v756, %v788
    %v821 = vadd.f32 %v757, %v789
    %v822 = vadd.f32 %v758, %v790
    %v823 = vadd.f32 %v759, %v791
    %v824 = vadd.f32 %v760, %v792
    %v825 = vadd.f32 %v761, %v793
    %v826 = vadd.f32 %v762, %v794
    %v827 = vadd.f32 %v763, %v795
    %v828 = vadd.f32 %v764, %v796
    %v829 = vadd.f32 %v765, %v797
    %v830 = vadd.f32 %v766, %v798
    %v831 = vadd.f32 %v767, %v799
    %v832 = vadd.f32 %v768, %v800
    %v833 = vadd.f32 %v769, %v801
    %v834 = vadd.f32 %v770, %v802
    %v835 = vadd.f32 %v771, %v803
    %v836 = vadd.f32 %v772, %v804
    %v837 = vadd.f32 %v773, %v805
    %v838 = vadd.f32 %v774, %v806
    %v839 = vadd.f32 %v775, %v807
    %v840 = vadd.f32 %v776, %v808
    %841 = vst [vmem:[%s4] sm:$0xff] %v809
    %842 = vst [vmem:[%s4 + $0x8] sm:$0xff] %v810
    %843 = vst [vmem:[%s4 + $0x10] sm:$0xff] %v811
    %844 = vst [vmem:[%s4 + $0x18] sm:$0xff] %v812
    %845 = vst [vmem:[%s4 + $0x20] sm:$0xff] %v813
    %846 = vst [vmem:[%s4 + $0x28] sm:$0xff] %v814
    %847 = vst [vmem:[%s4 + $0x30] sm:$0xff] %v815
    %848 = vst [vmem:[%s4 + $0x38] sm:$0xff] %v816
    %849 = vst [vmem:[%s4 + $0x40] sm:$0xff] %v817
    %850 = vst [vmem:[%s4 + $0x48] sm:$0xff] %v818
    %851 = vst [vmem:[%s4 + $0x50] sm:$0xff] %v819
    %852 = vst [vmem:[%s4 + $0x58] sm:$0xff] %v820
    %853 = vst [vmem:[%s4 + $0x60] sm:$0xff] %v821
    %854 = vst [vmem:[%s4 + $0x68] sm:$0xff] %v822
    %855 = vst [vmem:[%s4 + $0x70] sm:$0xff] %v823
    %856 = vst [vmem:[%s4 + $0x78] sm:$0xff] %v824
    %857 = vst [vmem:[%s4 + $0x80] sm:$0xff] %v825
    %858 = vst [vmem:[%s4 + $0x88] sm:$0xff] %v826
    %859 = vst [vmem:[%s4 + $0x90] sm:$0xff] %v827
    %860 = vst [vmem:[%s4 + $0x98] sm:$0xff] %v828
    %861 = vst [vmem:[%s4 + $0xa0] sm:$0xff] %v829
    %862 = vst [vmem:[%s4 + $0xa8] sm:$0xff] %v830
    %863 = vst [vmem:[%s4 + $0xb0] sm:$0xff] %v831
    %864 = vst [vmem:[%s4 + $0xb8] sm:$0xff] %v832
    %865 = vst [vmem:[%s4 + $0xc0] sm:$0xff] %v833
    %866 = vst [vmem:[%s4 + $0xc8] sm:$0xff] %v834
    %867 = vst [vmem:[%s4 + $0xd0] sm:$0xff] %v835
    %868 = vst [vmem:[%s4 + $0xd8] sm:$0xff] %v836
    %869 = vst [vmem:[%s4 + $0xe0] sm:$0xff] %v837
    %870 = vst [vmem:[%s4 + $0xe8] sm:$0xff] %v838
    %871 = vst [vmem:[%s4 + $0xf0] sm:$0xff] %v839
    %872 = vst [vmem:[%s4 + $0xf8] sm:$0xff] %v840
  $region21: #{_forward_impl.9} parent=0 // pred_fallthru
    _
  // Predicated region
  $region22: #{_forward_impl.9} parent=0 // pred_check
    _
  $region23: #{_forward_impl.9} parent=0 // pred_check_branch
    %874 = sbr.rel (0) target = $region25
  $region24: #{_forward_impl.9} parent=0 // pred_region
    _
  $region25: #{_forward_impl.9} parent=0 // pred_fallthru
    _
  // Predicated region
  $region26: #{_forward_impl.9} parent=0 // pred_check
    _
  $region27: #{_forward_impl.9} parent=0 // pred_check_branch
    %876 = sbr.rel (0) target = $region29
  $region28: #{_forward_impl.9} parent=0 // pred_region
    _
  $region29: #{_forward_impl.9} parent=0 // pred_fallthru
    _
  // Predicated region
  $region30: #{_forward_impl.9} parent=0 // pred_check
    _
  $region31: #{_forward_impl.9} parent=0 // pred_check_branch
    %878 = sbr.rel (0) target = $region33
  $region32: #{_forward_impl.9} parent=0 // pred_region
    _
  $region33: #{_forward_impl.9} parent=0 // pred_fallthru
    _
  // Predicated region
  $region34: #{_forward_impl.9} parent=0 // pred_check
    _
  $region35: #{_forward_impl.9} parent=0 // pred_check_branch
    %880 = sbr.rel (0) target = $region37
  $region36: #{_forward_impl.9} parent=0 // pred_region
    _
  $region37: #{_forward_impl.9} parent=0 // pred_fallthru
    _

// kernel: _forward_impl.16
$region0: #{_forward_impl.16}
  #allocation0 [shape = 'u32[]', space=smem, size = 0x4, offset = 0x4, fixed_abs, tag = 'smem constant byte address 0x4 - core index']
  #allocation1 [shape = 'u32[72,128]{1,0:T(1,128)}', space=vmem, size = 0x9000, scoped, tag = 'internal scratch']
  #allocation2 [shape = 'f32[256,128]{1,0:T(8,128)}', space=vmem, size = 0x20000, scoped, tag = 'scratch operand']
  %s0 = inlined_call_operand.vmem [shape: bf16[256,256], index: 0, kind: input, shape index: {}]
  %s1 = inlined_call_operand.vmem [shape: bf16[256,128], index: 1, kind: input, shape index: {}]
  %s2 = inlined_call_operand.vmem [shape: f32[256,128], index: 2, kind: input, shape index: {}, may-alias: {2,4}]
  %s3 = inlined_call_operand.hbm [shape: bf16[256,128], index: 3, kind: output, shape index: {0}]
  %s4 = inlined_call_operand.vmem [shape: f32[256,128], index: 4, kind: output, shape index: {1}, may-alias: {2,4}]
  %5 = xla_tuple %s3, %s4
  %s6 = sld [smem:[#allocation0]]
  $region38: #{_forward_impl.16} parent=0
    _
  %s8 = ssub.s32 1, %s6
  %s9 = scalar_select 0, %s8, %s6
  $region1: #{_forward_impl.16} parent=0
    #allocation3 [shape = 'u8[65536]{0}', space=vmem, size = 0x10000, scoped, tag = 'output window, operand 0, single buffered']
    #allocation4 [shape = 's32[1]{0}', space=sflag, size = 0x4, scoped, tag = 'scoped memory for _forward_impl.16']
    %10 = vsyncpa [#allocation4], 0
    // Predicated region
    $region2: #{_forward_impl.16} parent=1 // pred_check
      _
    $region3: #{_forward_impl.16} parent=1 // pred_check_branch
      %12 = sbr.rel (0) target = $region5
    $region4: #{_forward_impl.16} parent=1 // pred_region
      _
    $region5: #{_forward_impl.16} parent=1 // pred_fallthru
      _
    // Predicated region
    $region6: #{_forward_impl.16} parent=1 // pred_check
      _
    $region7: #{_forward_impl.16} parent=1 // pred_check_branch
      %14 = sbr.rel (0) target = $region9
    $region8: #{_forward_impl.16} parent=1 // pred_region
      _
    $region9: #{_forward_impl.16} parent=1 // pred_fallthru
      _
    // Predicated region
    $region10: #{_forward_impl.16} parent=1 // pred_check
      _
    $region11: #{_forward_impl.16} parent=1 // pred_check_branch
      %16 = sbr.rel (0) target = $region13
    $region12: #{_forward_impl.16} parent=1 // pred_region
      _
    $region13: #{_forward_impl.16} parent=1 // pred_fallthru
      _
    %p17 = scmp.eq.s32.totalorder 0, 0
    // Predicated region
    $region14: #{_forward_impl.16} parent=1 // pred_check
      %p18 = pneg %p17
    $region15: #{_forward_impl.16} parent=1 // pred_check_branch
      %20 = sbr.rel (%p18) target = $region17
    $region16: #{_forward_impl.16} parent=1 // pred_region
      %21 = vst [vmem:[#allocation2] sm:$0xff] 0.0
      %22 = vst [vmem:[#allocation2 + $0x8] sm:$0xff] 0.0
      %23 = vst [vmem:[#allocation2 + $0x10] sm:$0xff] 0.0
      %24 = vst [vmem:[#allocation2 + $0x18] sm:$0xff] 0.0
      %25 = vst [vmem:[#allocation2 + $0x20] sm:$0xff] 0.0
      %26 = vst [vmem:[#allocation2 + $0x28] sm:$0xff] 0.0
      %27 = vst [vmem:[#allocation2 + $0x30] sm:$0xff] 0.0
      %28 = vst [vmem:[#allocation2 + $0x38] sm:$0xff] 0.0
      %29 = vst [vmem:[#allocation2 + $0x40] sm:$0xff] 0.0
      %30 = vst [vmem:[#allocation2 + $0x48] sm:$0xff] 0.0
      %31 = vst [vmem:[#allocation2 + $0x50] sm:$0xff] 0.0
      %32 = vst [vmem:[#allocation2 + $0x58] sm:$0xff] 0.0
      %33 = vst [vmem:[#allocation2 + $0x60] sm:$0xff] 0.0
      %34 = vst [vmem:[#allocation2 + $0x68] sm:$0xff] 0.0
      %35 = vst [vmem:[#allocation2 + $0x70] sm:$0xff] 0.0
      %36 = vst [vmem:[#allocation2 + $0x78] sm:$0xff] 0.0
      %37 = vst [vmem:[#allocation2 + $0x80] sm:$0xff] 0.0
      %38 = vst [vmem:[#allocation2 + $0x88] sm:$0xff] 0.0
      %39 = vst [vmem:[#allocation2 + $0x90] sm:$0xff] 0.0
      %40 = vst [vmem:[#allocation2 + $0x98] sm:$0xff] 0.0
      %41 = vst [vmem:[#allocation2 + $0xa0] sm:$0xff] 0.0
      %42 = vst [vmem:[#allocation2 + $0xa8] sm:$0xff] 0.0
      %43 = vst [vmem:[#allocation2 + $0xb0] sm:$0xff] 0.0
      %44 = vst [vmem:[#allocation2 + $0xb8] sm:$0xff] 0.0
      %45 = vst [vmem:[#allocation2 + $0xc0] sm:$0xff] 0.0
      %46 = vst [vmem:[#allocation2 + $0xc8] sm:$0xff] 0.0
      %47 = vst [vmem:[#allocation2 + $0xd0] sm:$0xff] 0.0
      %48 = vst [vmem:[#allocation2 + $0xd8] sm:$0xff] 0.0
      %49 = vst [vmem:[#allocation2 + $0xe0] sm:$0xff] 0.0
      %50 = vst [vmem:[#allocation2 + $0xe8] sm:$0xff] 0.0
      %51 = vst [vmem:[#allocation2 + $0xf0] sm:$0xff] 0.0
      %52 = vst [vmem:[#allocation2 + $0xf8] sm:$0xff] 0.0
    $region17: #{_forward_impl.16} parent=1 // pred_fallthru
      _
    %v53 = vld [vmem:[#allocation2] sm:$0xff]
    %v54 = vld [vmem:[#allocation2 + $0x8] sm:$0xff]
    %v55 = vld [vmem:[#allocation2 + $0x10] sm:$0xff]
    %v56 = vld [vmem:[#allocation2 + $0x18] sm:$0xff]
    %v57 = vld [vmem:[#allocation2 + $0x20] sm:$0xff]
    %v58 = vld [vmem:[#allocation2 + $0x28] sm:$0xff]
    %v59 = vld [vmem:[#allocation2 + $0x30] sm:$0xff]
    %v60 = vld [vmem:[#allocation2 + $0x38] sm:$0xff]
    %v61 = vld [vmem:[#allocation2 + $0x40] sm:$0xff]
    %v62 = vld [vmem:[#allocation2 + $0x48] sm:$0xff]
    %v63 = vld [vmem:[#allocation2 + $0x50] sm:$0xff]
    %v64 = vld [vmem:[#allocation2 + $0x58] sm:$0xff]
    %v65 = vld [vmem:[#allocation2 + $0x60] sm:$0xff]
    %v66 = vld [vmem:[#allocation2 + $0x68] sm:$0xff]
    %v67 = vld [vmem:[#allocation2 + $0x70] sm:$0xff]
    %v68 = vld [vmem:[#allocation2 + $0x78] sm:$0xff]
    %v69 = vld [vmem:[#allocation2 + $0x80] sm:$0xff]
    %v70 = vld [vmem:[#allocation2 + $0x88] sm:$0xff]
    %v71 = vld [vmem:[#allocation2 + $0x90] sm:$0xff]
    %v72 = vld [vmem:[#allocation2 + $0x98] sm:$0xff]
    %v73 = vld [vmem:[#allocation2 + $0xa0] sm:$0xff]
    %v74 = vld [vmem:[#allocation2 + $0xa8] sm:$0xff]
    %v75 = vld [vmem:[#allocation2 + $0xb0] sm:$0xff]
    %v76 = vld [vmem:[#allocation2 + $0xb8] sm:$0xff]
    %v77 = vld [vmem:[#allocation2 + $0xc0] sm:$0xff]
    %v78 = vld [vmem:[#allocation2 + $0xc8] sm:$0xff]
    %v79 = vld [vmem:[#allocation2 + $0xd0] sm:$0xff]
    %v80 = vld [vmem:[#allocation2 + $0xd8] sm:$0xff]
    %v81 = vld [vmem:[#allocation2 + $0xe0] sm:$0xff]
    %v82 = vld [vmem:[#allocation2 + $0xe8] sm:$0xff]
    %v83 = vld [vmem:[#allocation2 + $0xf0] sm:$0xff]
    %v84 = vld [vmem:[#allocation2 + $0xf8] sm:$0xff]
    %v85 = vld [vmem:[%s0] sm:$0xff]
    %v86 = vld [vmem:[%s0 + $0x8] sm:$0xff]
    %v87 = vld [vmem:[%s0 + $0x10] sm:$0xff]
    %v88 = vld [vmem:[%s0 + $0x18] sm:$0xff]
    %v89 = vld [vmem:[%s0 + $0x20] sm:$0xff]
    %v90 = vld [vmem:[%s0 + $0x28] sm:$0xff]
    %v91 = vld [vmem:[%s0 + $0x30] sm:$0xff]
    %v92 = vld [vmem:[%s0 + $0x38] sm:$0xff]
    %v93 = vld [vmem:[%s0 + $0x40] sm:$0xff]
    %v94 = vld [vmem:[%s0 + $0x48] sm:$0xff]
    %v95 = vld [vmem:[%s0 + $0x50] sm:$0xff]
    %v96 = vld [vmem:[%s0 + $0x58] sm:$0xff]
    %v97 = vld [vmem:[%s0 + $0x60] sm:$0xff]
    %v98 = vld [vmem:[%s0 + $0x68] sm:$0xff]
    %v99 = vld [vmem:[%s0 + $0x70] sm:$0xff]
    %v100 = vld [vmem:[%s0 + $0x78] sm:$0xff]
    %v101 = vld [vmem:[%s0 + $0x80] sm:$0xff]
    %v102 = vld [vmem:[%s0 + $0x88] sm:$0xff]
    %v103 = vld [vmem:[%s0 + $0x90] sm:$0xff]
    %v104 = vld [vmem:[%s0 + $0x98] sm:$0xff]
    %v105 = vld [vmem:[%s0 + $0xa0] sm:$0xff]
    %v106 = vld [vmem:[%s0 + $0xa8] sm:$0xff]
    %v107 = vld [vmem:[%s0 + $0xb0] sm:$0xff]
    %v108 = vld [vmem:[%s0 + $0xb8] sm:$0xff]
    %v109 = vld [vmem:[%s0 + $0xc0] sm:$0xff]
    %v110 = vld [vmem:[%s0 + $0xc8] sm:$0xff]
    %v111 = vld [vmem:[%s0 + $0xd0] sm:$0xff]
    %v112 = vld [vmem:[%s0 + $0xd8] sm:$0xff]
    %v113 = vld [vmem:[%s0 + $0xe0] sm:$0xff]
    %v114 = vld [vmem:[%s0 + $0xe8] sm:$0xff]
    %v115 = vld [vmem:[%s0 + $0xf0] sm:$0xff]
    %v116 = vld [vmem:[%s0 + $0xf8] sm:$0xff]
    %v117 = vld [vmem:[%s1] sm:$0xf]
    %v118 = vld [vmem:[%s1 + $0x4] sm:$0xf]
    %v119 = vld [vmem:[%s1 + $0x8] sm:$0xf]
    %v120 = vld [vmem:[%s1 + $0xc] sm:$0xf]
    %v121 = vld [vmem:[%s1 + $0x10] sm:$0xf]
    %v122 = vld [vmem:[%s1 + $0x14] sm:$0xf]
    %v123 = vld [vmem:[%s1 + $0x18] sm:$0xf]
    %v124 = vld [vmem:[%s1 + $0x1c] sm:$0xf]
    %v125 = vld [vmem:[%s1 + $0x20] sm:$0xf]
    %v126 = vld [vmem:[%s1 + $0x24] sm:$0xf]
    %v127 = vld [vmem:[%s1 + $0x28] sm:$0xf]
    %v128 = vld [vmem:[%s1 + $0x2c] sm:$0xf]
    %v129 = vld [vmem:[%s1 + $0x30] sm:$0xf]
    %v130 = vld [vmem:[%s1 + $0x34] sm:$0xf]
    %v131 = vld [vmem:[%s1 + $0x38] sm:$0xf]
    %v132 = vld [vmem:[%s1 + $0x3c] sm:$0xf]
    %v133 = vld [vmem:[%s1 + $0x40] sm:$0xf]
    %v134 = vld [vmem:[%s1 + $0x44] sm:$0xf]
    %v135 = vld [vmem:[%s1 + $0x48] sm:$0xf]
    %v136 = vld [vmem:[%s1 + $0x4c] sm:$0xf]
    %v137 = vld [vmem:[%s1 + $0x50] sm:$0xf]
    %v138 = vld [vmem:[%s1 + $0x54] sm:$0xf]
    %v139 = vld [vmem:[%s1 + $0x58] sm:$0xf]
    %v140 = vld [vmem:[%s1 + $0x5c] sm:$0xf]
    %v141 = vld [vmem:[%s1 + $0x60] sm:$0xf]
    %v142 = vld [vmem:[%s1 + $0x64] sm:$0xf]
    %v143 = vld [vmem:[%s1 + $0x68] sm:$0xf]
    %v144 = vld [vmem:[%s1 + $0x6c] sm:$0xf]
    %v145 = vld [vmem:[%s1 + $0x70] sm:$0xf]
    %v146 = vld [vmem:[%s1 + $0x74] sm:$0xf]
    %v147 = vld [vmem:[%s1 + $0x78] sm:$0xf]
    %v148 = vld [vmem:[%s1 + $0x7c] sm:$0xf]
    %v181 = vunpack.c.l.b16 %v85
    %v182 = vunpack.c.h.b16 %v85
    %v183 = vunpack.c.l.b16 %v86
    %v184 = vunpack.c.h.b16 %v86
    %v185 = vunpack.c.l.b16 %v87
    %v186 = vunpack.c.h.b16 %v87
    %v187 = vunpack.c.l.b16 %v88
    %v188 = vunpack.c.h.b16 %v88
    %v189 = vunpack.c.l.b16 %v89
    %v190 = vunpack.c.h.b16 %v89
    %v191 = vunpack.c.l.b16 %v90
    %v192 = vunpack.c.h.b16 %v90
    %v193 = vunpack.c.l.b16 %v91
    %v194 = vunpack.c.h.b16 %v91
    %v195 = vunpack.c.l.b16 %v92
    %v196 = vunpack.c.h.b16 %v92
    %v197 = vunpack.c.l.b16 %v93
    %v198 = vunpack.c.h.b16 %v93
    %v199 = vunpack.c.l.b16 %v94
    %v200 = vunpack.c.h.b16 %v94
    %v201 = vunpack.c.l.b16 %v95
    %v202 = vunpack.c.h.b16 %v95
    %v203 = vunpack.c.l.b16 %v96
    %v204 = vunpack.c.h.b16 %v96
    %v205 = vunpack.c.l.b16 %v97
    %v206 = vunpack.c.h.b16 %v97
    %v207 = vunpack.c.l.b16 %v98
    %v208 = vunpack.c.h.b16 %v98
    %v209 = vunpack.c.l.b16 %v99
    %v210 = vunpack.c.h.b16 %v99
    %v211 = vunpack.c.l.b16 %v100
    %v212 = vunpack.c.h.b16 %v100
    %v213 = vunpack.c.l.b16 %v101
    %v214 = vunpack.c.h.b16 %v101
    %v215 = vunpack.c.l.b16 %v102
    %v216 = vunpack.c.h.b16 %v102
    %v217 = vunpack.c.l.b16 %v103
    %v218 = vunpack.c.h.b16 %v103
    %v219 = vunpack.c.l.b16 %v104
    %v220 = vunpack.c.h.b16 %v104
    %v221 = vunpack.c.l.b16 %v105
    %v222 = vunpack.c.h.b16 %v105
    %v223 = vunpack.c.l.b16 %v106
    %v224 = vunpack.c.h.b16 %v106
    %v225 = vunpack.c.l.b16 %v107
    %v226 = vunpack.c.h.b16 %v107
    %v227 = vunpack.c.l.b16 %v108
    %v228 = vunpack.c.h.b16 %v108
    %v229 = vunpack.c.l.b16 %v109
    %v230 = vunpack.c.h.b16 %v109
    %v231 = vunpack.c.l.b16 %v110
    %v232 = vunpack.c.h.b16 %v110
    %v233 = vunpack.c.l.b16 %v111
    %v234 = vunpack.c.h.b16 %v111
    %v235 = vunpack.c.l.b16 %v112
    %v236 = vunpack.c.h.b16 %v112
    %v237 = vunpack.c.l.b16 %v113
    %v238 = vunpack.c.h.b16 %v113
    %v239 = vunpack.c.l.b16 %v114
    %v240 = vunpack.c.h.b16 %v114
    %v241 = vunpack.c.l.b16 %v115
    %v242 = vunpack.c.h.b16 %v115
    %v243 = vunpack.c.l.b16 %v116
    %v244 = vunpack.c.h.b16 %v116
    %v245 = vpack.c.b16 %v183, %v181
    %v246 = vpack.c.b16 %v184, %v182
    %v247 = vpack.c.b16 %v187, %v185
    %v248 = vpack.c.b16 %v188, %v186
    %v249 = vpack.c.b16 %v191, %v189
    %v250 = vpack.c.b16 %v192, %v190
    %v251 = vpack.c.b16 %v195, %v193
    %v252 = vpack.c.b16 %v196, %v194
    %v253 = vpack.c.b16 %v199, %v197
    %v254 = vpack.c.b16 %v200, %v198
    %v255 = vpack.c.b16 %v203, %v201
    %v256 = vpack.c.b16 %v204, %v202
    %v257 = vpack.c.b16 %v207, %v205
    %v258 = vpack.c.b16 %v208, %v206
    %v259 = vpack.c.b16 %v211, %v209
    %v260 = vpack.c.b16 %v212, %v210
    %v261 = vpack.c.b16 %v215, %v213
    %v262 = vpack.c.b16 %v216, %v214
    %v263 = vpack.c.b16 %v219, %v217
    %v264 = vpack.c.b16 %v220, %v218
    %v265 = vpack.c.b16 %v223, %v221
    %v266 = vpack.c.b16 %v224, %v222
    %v267 = vpack.c.b16 %v227, %v225
    %v268 = vpack.c.b16 %v228, %v226
    %v269 = vpack.c.b16 %v231, %v229
    %v270 = vpack.c.b16 %v232, %v230
    %v271 = vpack.c.b16 %v235, %v233
    %v272 = vpack.c.b16 %v236, %v234
    %v273 = vpack.c.b16 %v239, %v237
    %v274 = vpack.c.b16 %v240, %v238
    %v275 = vpack.c.b16 %v243, %v241
    %v276 = vpack.c.b16 %v244, %v242
    %v341 = vunpack.c.l.b16 %v117
    %v342 = vunpack.c.l.b16 %v118
    %v343 = vunpack.c.l.b16 %v119
    %v344 = vunpack.c.l.b16 %v120
    %v345 = vunpack.c.l.b16 %v121
    %v346 = vunpack.c.l.b16 %v122
    %v347 = vunpack.c.l.b16 %v123
    %v348 = vunpack.c.l.b16 %v124
    %v349 = vunpack.c.l.b16 %v125
    %v350 = vunpack.c.l.b16 %v126
    %v351 = vunpack.c.l.b16 %v127
    %v352 = vunpack.c.l.b16 %v128
    %v353 = vunpack.c.l.b16 %v129
    %v354 = vunpack.c.l.b16 %v130
    %v355 = vunpack.c.l.b16 %v131
    %v356 = vunpack.c.l.b16 %v132
    %v357 = vunpack.c.l.b16 %v133
    %v358 = vunpack.c.l.b16 %v134
    %v359 = vunpack.c.l.b16 %v135
    %v360 = vunpack.c.l.b16 %v136
    %v361 = vunpack.c.l.b16 %v137
    %v362 = vunpack.c.l.b16 %v138
    %v363 = vunpack.c.l.b16 %v139
    %v364 = vunpack.c.l.b16 %v140
    %v365 = vunpack.c.l.b16 %v141
    %v366 = vunpack.c.l.b16 %v142
    %v367 = vunpack.c.l.b16 %v143
    %v368 = vunpack.c.l.b16 %v144
    %v369 = vunpack.c.l.b16 %v145
    %v370 = vunpack.c.l.b16 %v146
    %v371 = vunpack.c.l.b16 %v147
    %v372 = vunpack.c.l.b16 %v148
    %v373 = vpack.c.b16 %v342, %v341
    %v374 = vpack.c.b16 %v344, %v343
    %v375 = vpack.c.b16 %v346, %v345
    %v376 = vpack.c.b16 %v348, %v347
    %v377 = vpack.c.b16 %v350, %v349
    %v378 = vpack.c.b16 %v352, %v351
    %v379 = vpack.c.b16 %v354, %v353
    %v380 = vpack.c.b16 %v356, %v355
    %v381 = vpack.c.b16 %v358, %v357
    %v382 = vpack.c.b16 %v360, %v359
    %v383 = vpack.c.b16 %v362, %v361
    %v384 = vpack.c.b16 %v364, %v363
    %v385 = vpack.c.b16 %v366, %v365
    %v386 = vpack.c.b16 %v368, %v367
    %v387 = vpack.c.b16 %v370, %v369
    %v388 = vpack.c.b16 %v372, %v371
    %405 = vmatpush.bf16.msra.mxu0 %v380
    %406 = vmatpush.bf16.msra.mxu0 %v379
    %407 = vmatpush.bf16.msra.mxu0 %v378
    %408 = vmatpush.bf16.msra.mxu0 %v377
    %409 = vmatpush.bf16.msra.mxu0 %v376
    %410 = vmatpush.bf16.msra.mxu0 %v375
    %411 = vmatpush.bf16.msra.mxu0 %v374
    %412 = vmatpush.bf16.msra.mxu0 %v373
    %413 = vmatmul.bf16.gmra.mxu0 %v245
    %v414 = vpop.f32.mrf.mxu0
    %v415 = vadd.f32 0.0, %v414
    %v416 = vpop.f32.mrf.mxu0
    %v417 = vadd.f32 0.0, %v416
    %418 = vmatmul.bf16.gmra.mxu0 %v247
    %v419 = vpop.f32.mrf.mxu0
    %v420 = vadd.f32 0.0, %v419
    %v421 = vpop.f32.mrf.mxu0
    %v422 = vadd.f32 0.0, %v421
    %423 = vmatmul.bf16.gmra.mxu0 %v249
    %v424 = vpop.f32.mrf.mxu0
    %v425 = vadd.f32 0.0, %v424
    %v426 = vpop.f32.mrf.mxu0
    %v427 = vadd.f32 0.0, %v426
    %428 = vmatmul.bf16.gmra.mxu0 %v251
    %v429 = vpop.f32.mrf.mxu0
    %v430 = vadd.f32 0.0, %v429
    %v431 = vpop.f32.mrf.mxu0
    %v432 = vadd.f32 0.0, %v431
    %433 = vmatmul.bf16.gmra.mxu0 %v253
    %v434 = vpop.f32.mrf.mxu0
    %v435 = vadd.f32 0.0, %v434
    %v436 = vpop.f32.mrf.mxu0
    %v437 = vadd.f32 0.0, %v436
    %438 = vmatmul.bf16.gmra.mxu0 %v255
    %v439 = vpop.f32.mrf.mxu0
    %v440 = vadd.f32 0.0, %v439
    %v441 = vpop.f32.mrf.mxu0
    %v442 = vadd.f32 0.0, %v441
    %443 = vmatmul.bf16.gmra.mxu0 %v257
    %v444 = vpop.f32.mrf.mxu0
    %v445 = vadd.f32 0.0, %v444
    %v446 = vpop.f32.mrf.mxu0
    %v447 = vadd.f32 0.0, %v446
    %448 = vmatmul.bf16.gmra.mxu0 %v259
    %v449 = vpop.f32.mrf.mxu0
    %v450 = vadd.f32 0.0, %v449
    %v451 = vpop.f32.mrf.mxu0
    %v452 = vadd.f32 0.0, %v451
    %453 = vmatmul.bf16.gmra.mxu0 %v261
    %v454 = vpop.f32.mrf.mxu0
    %v455 = vadd.f32 0.0, %v454
    %v456 = vpop.f32.mrf.mxu0
    %v457 = vadd.f32 0.0, %v456
    %458 = vmatmul.bf16.gmra.mxu0 %v263
    %v459 = vpop.f32.mrf.mxu0
    %v460 = vadd.f32 0.0, %v459
    %v461 = vpop.f32.mrf.mxu0
    %v462 = vadd.f32 0.0, %v461
    %463 = vmatmul.bf16.gmra.mxu0 %v265
    %v464 = vpop.f32.mrf.mxu0
    %v465 = vadd.f32 0.0, %v464
    %v466 = vpop.f32.mrf.mxu0
    %v467 = vadd.f32 0.0, %v466
    %468 = vmatmul.bf16.gmra.mxu0 %v267
    %v469 = vpop.f32.mrf.mxu0
    %v470 = vadd.f32 0.0, %v469
    %v471 = vpop.f32.mrf.mxu0
    %v472 = vadd.f32 0.0, %v471
    %473 = vmatmul.bf16.gmra.mxu0 %v269
    %v474 = vpop.f32.mrf.mxu0
    %v475 = vadd.f32 0.0, %v474
    %v476 = vpop.f32.mrf.mxu0
    %v477 = vadd.f32 0.0, %v476
    %478 = vmatmul.bf16.gmra.mxu0 %v271
    %v479 = vpop.f32.mrf.mxu0
    %v480 = vadd.f32 0.0, %v479
    %v481 = vpop.f32.mrf.mxu0
    %v482 = vadd.f32 0.0, %v481
    %483 = vmatmul.bf16.gmra.mxu0 %v273
    %v484 = vpop.f32.mrf.mxu0
    %v485 = vadd.f32 0.0, %v484
    %v486 = vpop.f32.mrf.mxu0
    %v487 = vadd.f32 0.0, %v486
    %488 = vmatmul.bf16.gmra.mxu0 %v275
    %v489 = vpop.f32.mrf.mxu0
    %v490 = vadd.f32 0.0, %v489
    %v491 = vpop.f32.mrf.mxu0
    %v492 = vadd.f32 0.0, %v491
    %493 = vdwg.mxu0
    %494 = vmatpush.bf16.msra.mxu0 %v388
    %495 = vmatpush.bf16.msra.mxu0 %v387
    %496 = vmatpush.bf16.msra.mxu0 %v386
    %497 = vmatpush.bf16.msra.mxu0 %v385
    %498 = vmatpush.bf16.msra.mxu0 %v384
    %499 = vmatpush.bf16.msra.mxu0 %v383
    %500 = vmatpush.bf16.msra.mxu0 %v382
    %501 = vmatpush.bf16.msra.mxu0 %v381
    %502 = vmatmul.bf16.gmra.mxu0 %v246
    %v503 = vpop.f32.mrf.mxu0
    %v504 = vadd.f32 %v415, %v503
    %v505 = vpop.f32.mrf.mxu0
    %v506 = vadd.f32 %v417, %v505
    %507 = vmatmul.bf16.gmra.mxu0 %v248
    %v508 = vpop.f32.mrf.mxu0
    %v509 = vadd.f32 %v420, %v508
    %v510 = vpop.f32.mrf.mxu0
    %v511 = vadd.f32 %v422, %v510
    %512 = vmatmul.bf16.gmra.mxu0 %v250
    %v513 = vpop.f32.mrf.mxu0
    %v514 = vadd.f32 %v425, %v513
    %v515 = vpop.f32.mrf.mxu0
    %v516 = vadd.f32 %v427, %v515
    %517 = vmatmul.bf16.gmra.mxu0 %v252
    %v518 = vpop.f32.mrf.mxu0
    %v519 = vadd.f32 %v430, %v518
    %v520 = vpop.f32.mrf.mxu0
    %v521 = vadd.f32 %v432, %v520
    %522 = vmatmul.bf16.gmra.mxu0 %v254
    %v523 = vpop.f32.mrf.mxu0
    %v524 = vadd.f32 %v435, %v523
    %v525 = vpop.f32.mrf.mxu0
    %v526 = vadd.f32 %v437, %v525
    %527 = vmatmul.bf16.gmra.mxu0 %v256
    %v528 = vpop.f32.mrf.mxu0
    %v529 = vadd.f32 %v440, %v528
    %v530 = vpop.f32.mrf.mxu0
    %v531 = vadd.f32 %v442, %v530
    %532 = vmatmul.bf16.gmra.mxu0 %v258
    %v533 = vpop.f32.mrf.mxu0
    %v534 = vadd.f32 %v445, %v533
    %v535 = vpop.f32.mrf.mxu0
    %v536 = vadd.f32 %v447, %v535
    %537 = vmatmul.bf16.gmra.mxu0 %v260
    %v538 = vpop.f32.mrf.mxu0
    %v539 = vadd.f32 %v450, %v538
    %v540 = vpop.f32.mrf.mxu0
    %v541 = vadd.f32 %v452, %v540
    %542 = vmatmul.bf16.gmra.mxu0 %v262
    %v543 = vpop.f32.mrf.mxu0
    %v544 = vadd.f32 %v455, %v543
    %v545 = vpop.f32.mrf.mxu0
    %v546 = vadd.f32 %v457, %v545
    %547 = vmatmul.bf16.gmra.mxu0 %v264
    %v548 = vpop.f32.mrf.mxu0
    %v549 = vadd.f32 %v460, %v548
    %v550 = vpop.f32.mrf.mxu0
    %v551 = vadd.f32 %v462, %v550
    %552 = vmatmul.bf16.gmra.mxu0 %v266
    %v553 = vpop.f32.mrf.mxu0
    %v554 = vadd.f32 %v465, %v553
    %v555 = vpop.f32.mrf.mxu0
    %v556 = vadd.f32 %v467, %v555
    %557 = vmatmul.bf16.gmra.mxu0 %v268
    %v558 = vpop.f32.mrf.mxu0
    %v559 = vadd.f32 %v470, %v558
    %v560 = vpop.f32.mrf.mxu0
    %v561 = vadd.f32 %v472, %v560
    %562 = vmatmul.bf16.gmra.mxu0 %v270
    %v563 = vpop.f32.mrf.mxu0
    %v564 = vadd.f32 %v475, %v563
    %v565 = vpop.f32.mrf.mxu0
    %v566 = vadd.f32 %v477, %v565
    %567 = vmatmul.bf16.gmra.mxu0 %v272
    %v568 = vpop.f32.mrf.mxu0
    %v569 = vadd.f32 %v480, %v568
    %v570 = vpop.f32.mrf.mxu0
    %v571 = vadd.f32 %v482, %v570
    %572 = vmatmul.bf16.gmra.mxu0 %v274
    %v573 = vpop.f32.mrf.mxu0
    %v574 = vadd.f32 %v485, %v573
    %v575 = vpop.f32.mrf.mxu0
    %v576 = vadd.f32 %v487, %v575
    %577 = vmatmul.bf16.gmra.mxu0 %v276
    %v578 = vpop.f32.mrf.mxu0
    %v579 = vadd.f32 %v490, %v578
    %v580 = vpop.f32.mrf.mxu0
    %v581 = vadd.f32 %v492, %v580
    %582 = vdwg.mxu0
    %v583 = vadd.f32 %v53, %v504
    %v584 = vadd.f32 %v54, %v506
    %v585 = vadd.f32 %v55, %v509
    %v586 = vadd.f32 %v56, %v511
    %v587 = vadd.f32 %v57, %v514
    %v588 = vadd.f32 %v58, %v516
    %v589 = vadd.f32 %v59, %v519
    %v590 = vadd.f32 %v60, %v521
    %v591 = vadd.f32 %v61, %v524
    %v592 = vadd.f32 %v62, %v526
    %v593 = vadd.f32 %v63, %v529
    %v594 = vadd.f32 %v64, %v531
    %v595 = vadd.f32 %v65, %v534
    %v596 = vadd.f32 %v66, %v536
    %v597 = vadd.f32 %v67, %v539
    %v598 = vadd.f32 %v68, %v541
    %v599 = vadd.f32 %v69, %v544
    %v600 = vadd.f32 %v70, %v546
    %v601 = vadd.f32 %v71, %v549
    %v602 = vadd.f32 %v72, %v551
    %v603 = vadd.f32 %v73, %v554
    %v604 = vadd.f32 %v74, %v556
    %v605 = vadd.f32 %v75, %v559
    %v606 = vadd.f32 %v76, %v561
    %v607 = vadd.f32 %v77, %v564
    %v608 = vadd.f32 %v78, %v566
    %v609 = vadd.f32 %v79, %v569
    %v610 = vadd.f32 %v80, %v571
    %v611 = vadd.f32 %v81, %v574
    %v612 = vadd.f32 %v82, %v576
    %v613 = vadd.f32 %v83, %v579
    %v614 = vadd.f32 %v84, %v581
    %615 = vst [vmem:[#allocation2] sm:$0xff] %v583
    %616 = vst [vmem:[#allocation2 + $0x8] sm:$0xff] %v584
    %617 = vst [vmem:[#allocation2 + $0x10] sm:$0xff] %v585
    %618 = vst [vmem:[#allocation2 + $0x18] sm:$0xff] %v586
    %619 = vst [vmem:[#allocation2 + $0x20] sm:$0xff] %v587
    %620 = vst [vmem:[#allocation2 + $0x28] sm:$0xff] %v588
    %621 = vst [vmem:[#allocation2 + $0x30] sm:$0xff] %v589
    %622 = vst [vmem:[#allocation2 + $0x38] sm:$0xff] %v590
    %623 = vst [vmem:[#allocation2 + $0x40] sm:$0xff] %v591
    %624 = vst [vmem:[#allocation2 + $0x48] sm:$0xff] %v592
    %625 = vst [vmem:[#allocation2 + $0x50] sm:$0xff] %v593
    %626 = vst [vmem:[#allocation2 + $0x58] sm:$0xff] %v594
    %627 = vst [vmem:[#allocation2 + $0x60] sm:$0xff] %v595
    %628 = vst [vmem:[#allocation2 + $0x68] sm:$0xff] %v596
    %629 = vst [vmem:[#allocation2 + $0x70] sm:$0xff] %v597
    %630 = vst [vmem:[#allocation2 + $0x78] sm:$0xff] %v598
    %631 = vst [vmem:[#allocation2 + $0x80] sm:$0xff] %v599
    %632 = vst [vmem:[#allocation2 + $0x88] sm:$0xff] %v600
    %633 = vst [vmem:[#allocation2 + $0x90] sm:$0xff] %v601
    %634 = vst [vmem:[#allocation2 + $0x98] sm:$0xff] %v602
    %635 = vst [vmem:[#allocation2 + $0xa0] sm:$0xff] %v603
    %636 = vst [vmem:[#allocation2 + $0xa8] sm:$0xff] %v604
    %637 = vst [vmem:[#allocation2 + $0xb0] sm:$0xff] %v605
    %638 = vst [vmem:[#allocation2 + $0xb8] sm:$0xff] %v606
    %639 = vst [vmem:[#allocation2 + $0xc0] sm:$0xff] %v607
    %640 = vst [vmem:[#allocation2 + $0xc8] sm:$0xff] %v608
    %641 = vst [vmem:[#allocation2 + $0xd0] sm:$0xff] %v609
    %642 = vst [vmem:[#allocation2 + $0xd8] sm:$0xff] %v610
    %643 = vst [vmem:[#allocation2 + $0xe0] sm:$0xff] %v611
    %644 = vst [vmem:[#allocation2 + $0xe8] sm:$0xff] %v612
    %645 = vst [vmem:[#allocation2 + $0xf0] sm:$0xff] %v613
    %646 = vst [vmem:[#allocation2 + $0xf8] sm:$0xff] %v614
    // Predicated region
    $region18: #{_forward_impl.16} parent=1 // pred_check
      %p647 = pneg %p17
    $region19: #{_forward_impl.16} parent=1 // pred_check_branch
      %649 = sbr.rel (%p647) target = $region21
    $region20: #{_forward_impl.16} parent=1 // pred_region
      %v650 = vld [vmem:[#allocation2] sm:$0xff]
      %v651 = vld [vmem:[#allocation2 + $0x8] sm:$0xff]
      %v652 = vld [vmem:[#allocation2 + $0x10] sm:$0xff]
      %v653 = vld [vmem:[#allocation2 + $0x18] sm:$0xff]
      %v654 = vld [vmem:[#allocation2 + $0x20] sm:$0xff]
      %v655 = vld [vmem:[#allocation2 + $0x28] sm:$0xff]
      %v656 = vld [vmem:[#allocation2 + $0x30] sm:$0xff]
      %v657 = vld [vmem:[#allocation2 + $0x38] sm:$0xff]
      %v658 = vld [vmem:[#allocation2 + $0x40] sm:$0xff]
      %v659 = vld [vmem:[#allocation2 + $0x48] sm:$0xff]
      %v660 = vld [vmem:[#allocation2 + $0x50] sm:$0xff]
      %v661 = vld [vmem:[#allocation2 + $0x58] sm:$0xff]
      %v662 = vld [vmem:[#allocation2 + $0x60] sm:$0xff]
      %v663 = vld [vmem:[#allocation2 + $0x68] sm:$0xff]
      %v664 = vld [vmem:[#allocation2 + $0x70] sm:$0xff]
      %v665 = vld [vmem:[#allocation2 + $0x78] sm:$0xff]
      %v666 = vld [vmem:[#allocation2 + $0x80] sm:$0xff]
      %v667 = vld [vmem:[#allocation2 + $0x88] sm:$0xff]
      %v668 = vld [vmem:[#allocation2 + $0x90] sm:$0xff]
      %v669 = vld [vmem:[#allocation2 + $0x98] sm:$0xff]
      %v670 = vld [vmem:[#allocation2 + $0xa0] sm:$0xff]
      %v671 = vld [vmem:[#allocation2 + $0xa8] sm:$0xff]
      %v672 = vld [vmem:[#allocation2 + $0xb0] sm:$0xff]
      %v673 = vld [vmem:[#allocation2 + $0xb8] sm:$0xff]
      %v674 = vld [vmem:[#allocation2 + $0xc0] sm:$0xff]
      %v675 = vld [vmem:[#allocation2 + $0xc8] sm:$0xff]
      %v676 = vld [vmem:[#allocation2 + $0xd0] sm:$0xff]
      %v677 = vld [vmem:[#allocation2 + $0xd8] sm:$0xff]
      %v678 = vld [vmem:[#allocation2 + $0xe0] sm:$0xff]
      %v679 = vld [vmem:[#allocation2 + $0xe8] sm:$0xff]
      %v680 = vld [vmem:[#allocation2 + $0xf0] sm:$0xff]
      %v681 = vld [vmem:[#allocation2 + $0xf8] sm:$0xff]
      %v682 = vpack.c.bf16 %v650, %v650
      %v683 = vpack.c.bf16 %v651, %v651
      %v684 = vpack.c.bf16 %v652, %v652
      %v685 = vpack.c.bf16 %v653, %v653
      %v686 = vpack.c.bf16 %v654, %v654
      %v687 = vpack.c.bf16 %v655, %v655
      %v688 = vpack.c.bf16 %v656, %v656
      %v689 = vpack.c.bf16 %v657, %v657
      %v690 = vpack.c.bf16 %v658, %v658
      %v691 = vpack.c.bf16 %v659, %v659
      %v692 = vpack.c.bf16 %v660, %v660
      %v693 = vpack.c.bf16 %v661, %v661
      %v694 = vpack.c.bf16 %v662, %v662
      %v695 = vpack.c.bf16 %v663, %v663
      %v696 = vpack.c.bf16 %v664, %v664
      %v697 = vpack.c.bf16 %v665, %v665
      %v698 = vpack.c.bf16 %v666, %v666
      %v699 = vpack.c.bf16 %v667, %v667
      %v700 = vpack.c.bf16 %v668, %v668
      %v701 = vpack.c.bf16 %v669, %v669
      %v702 = vpack.c.bf16 %v670, %v670
      %v703 = vpack.c.bf16 %v671, %v671
      %v704 = vpack.c.bf16 %v672, %v672
      %v705 = vpack.c.bf16 %v673, %v673
      %v706 = vpack.c.bf16 %v674, %v674
      %v707 = vpack.c.bf16 %v675, %v675
      %v708 = vpack.c.bf16 %v676, %v676
      %v709 = vpack.c.bf16 %v677, %v677
      %v710 = vpack.c.bf16 %v678, %v678
      %v711 = vpack.c.bf16 %v679, %v679
      %v712 = vpack.c.bf16 %v680, %v680
      %v713 = vpack.c.bf16 %v681, %v681
      %714 = vst [vmem:[#allocation3] sm:$0xf] %v682
      %715 = vst [vmem:[#allocation3 + $0x4] sm:$0xf] %v683
      %716 = vst [vmem:[#allocation3 + $0x8] sm:$0xf] %v684
      %717 = vst [vmem:[#allocation3 + $0xc] sm:$0xf] %v685
      %718 = vst [vmem:[#allocation3 + $0x10] sm:$0xf] %v686
      %719 = vst [vmem:[#allocation3 + $0x14] sm:$0xf] %v687
      %720 = vst [vmem:[#allocation3 + $0x18] sm:$0xf] %v688
      %721 = vst [vmem:[#allocation3 + $0x1c] sm:$0xf] %v689
      %722 = vst [vmem:[#allocation3 + $0x20] sm:$0xf] %v690
      %723 = vst [vmem:[#allocation3 + $0x24] sm:$0xf] %v691
      %724 = vst [vmem:[#allocation3 + $0x28] sm:$0xf] %v692
      %725 = vst [vmem:[#allocation3 + $0x2c] sm:$0xf] %v693
      %726 = vst [vmem:[#allocation3 + $0x30] sm:$0xf] %v694
      %727 = vst [vmem:[#allocation3 + $0x34] sm:$0xf] %v695
      %728 = vst [vmem:[#allocation3 + $0x38] sm:$0xf] %v696
      %729 = vst [vmem:[#allocation3 + $0x3c] sm:$0xf] %v697
      %730 = vst [vmem:[#allocation3 + $0x40] sm:$0xf] %v698
      %731 = vst [vmem:[#allocation3 + $0x44] sm:$0xf] %v699
      %732 = vst [vmem:[#allocation3 + $0x48] sm:$0xf] %v700
      %733 = vst [vmem:[#allocation3 + $0x4c] sm:$0xf] %v701
      %734 = vst [vmem:[#allocation3 + $0x50] sm:$0xf] %v702
      %735 = vst [vmem:[#allocation3 + $0x54] sm:$0xf] %v703
      %736 = vst [vmem:[#allocation3 + $0x58] sm:$0xf] %v704
      %737 = vst [vmem:[#allocation3 + $0x5c] sm:$0xf] %v705
      %738 = vst [vmem:[#allocation3 + $0x60] sm:$0xf] %v706
      %739 = vst [vmem:[#allocation3 + $0x64] sm:$0xf] %v707
      %740 = vst [vmem:[#allocation3 + $0x68] sm:$0xf] %v708
      %741 = vst [vmem:[#allocation3 + $0x6c] sm:$0xf] %v709
      %742 = vst [vmem:[#allocation3 + $0x70] sm:$0xf] %v710
      %743 = vst [vmem:[#allocation3 + $0x74] sm:$0xf] %v711
      %744 = vst [vmem:[#allocation3 + $0x78] sm:$0xf] %v712
      %745 = vst [vmem:[#allocation3 + $0x7c] sm:$0xf] %v713
      %v746 = vld [vmem:[%s2] sm:$0xff]
      %v747 = vld [vmem:[%s2 + $0x8] sm:$0xff]
      %v748 = vld [vmem:[%s2 + $0x10] sm:$0xff]
      %v749 = vld [vmem:[%s2 + $0x18] sm:$0xff]
      %v750 = vld [vmem:[%s2 + $0x20] sm:$0xff]
      %v751 = vld [vmem:[%s2 + $0x28] sm:$0xff]
      %v752 = vld [vmem:[%s2 + $0x30] sm:$0xff]
      %v753 = vld [vmem:[%s2 + $0x38] sm:$0xff]
      %v754 = vld [vmem:[%s2 + $0x40] sm:$0xff]
      %v755 = vld [vmem:[%s2 + $0x48] sm:$0xff]
      %v756 = vld [vmem:[%s2 + $0x50] sm:$0xff]
      %v757 = vld [vmem:[%s2 + $0x58] sm:$0xff]
      %v758 = vld [vmem:[%s2 + $0x60] sm:$0xff]
      %v759 = vld [vmem:[%s2 + $0x68] sm:$0xff]
      %v760 = vld [vmem:[%s2 + $0x70] sm:$0xff]
      %v761 = vld [vmem:[%s2 + $0x78] sm:$0xff]
      %v762 = vld [vmem:[%s2 + $0x80] sm:$0xff]
      %v763 = vld [vmem:[%s2 + $0x88] sm:$0xff]
      %v764 = vld [vmem:[%s2 + $0x90] sm:$0xff]
      %v765 = vld [vmem:[%s2 + $0x98] sm:$0xff]
      %v766 = vld [vmem:[%s2 + $0xa0] sm:$0xff]
      %v767 = vld [vmem:[%s2 + $0xa8] sm:$0xff]
      %v768 = vld [vmem:[%s2 + $0xb0] sm:$0xff]
      %v769 = vld [vmem:[%s2 + $0xb8] sm:$0xff]
      %v770 = vld [vmem:[%s2 + $0xc0] sm:$0xff]
      %v771 = vld [vmem:[%s2 + $0xc8] sm:$0xff]
      %v772 = vld [vmem:[%s2 + $0xd0] sm:$0xff]
      %v773 = vld [vmem:[%s2 + $0xd8] sm:$0xff]
      %v774 = vld [vmem:[%s2 + $0xe0] sm:$0xff]
      %v775 = vld [vmem:[%s2 + $0xe8] sm:$0xff]
      %v776 = vld [vmem:[%s2 + $0xf0] sm:$0xff]
      %v777 = vld [vmem:[%s2 + $0xf8] sm:$0xff]
      %v778 = vld [vmem:[#allocation2] sm:$0xff]
      %v779 = vld [vmem:[#allocation2 + $0x8] sm:$0xff]
      %v780 = vld [vmem:[#allocation2 + $0x10] sm:$0xff]
      %v781 = vld [vmem:[#allocation2 + $0x18] sm:$0xff]
      %v782 = vld [vmem:[#allocation2 + $0x20] sm:$0xff]
      %v783 = vld [vmem:[#allocation2 + $0x28] sm:$0xff]
      %v784 = vld [vmem:[#allocation2 + $0x30] sm:$0xff]
      %v785 = vld [vmem:[#allocation2 + $0x38] sm:$0xff]
      %v786 = vld [vmem:[#allocation2 + $0x40] sm:$0xff]
      %v787 = vld [vmem:[#allocation2 + $0x48] sm:$0xff]
      %v788 = vld [vmem:[#allocation2 + $0x50] sm:$0xff]
      %v789 = vld [vmem:[#allocation2 + $0x58] sm:$0xff]
      %v790 = vld [vmem:[#allocation2 + $0x60] sm:$0xff]
      %v791 = vld [vmem:[#allocation2 + $0x68] sm:$0xff]
      %v792 = vld [vmem:[#allocation2 + $0x70] sm:$0xff]
      %v793 = vld [vmem:[#allocation2 + $0x78] sm:$0xff]
      %v794 = vld [vmem:[#allocation2 + $0x80] sm:$0xff]
      %v795 = vld [vmem:[#allocation2 + $0x88] sm:$0xff]
      %v796 = vld [vmem:[#allocation2 + $0x90] sm:$0xff]
      %v797 = vld [vmem:[#allocation2 + $0x98] sm:$0xff]
      %v798 = vld [vmem:[#allocation2 + $0xa0] sm:$0xff]
      %v799 = vld [vmem:[#allocation2 + $0xa8] sm:$0xff]
      %v800 = vld [vmem:[#allocation2 + $0xb0] sm:$0xff]
      %v801 = vld [vmem:[#allocation2 + $0xb8] sm:$0xff]
      %v802 = vld [vmem:[#allocation2 + $0xc0] sm:$0xff]
      %v803 = vld [vmem:[#allocation2 + $0xc8] sm:$0xff]
      %v804 = vld [vmem:[#allocation2 + $0xd0] sm:$0xff]
      %v805 = vld [vmem:[#allocation2 + $0xd8] sm:$0xff]
      %v806 = vld [vmem:[#allocation2 + $0xe0] sm:$0xff]
      %v807 = vld [vmem:[#allocation2 + $0xe8] sm:$0xff]
      %v808 = vld [vmem:[#allocation2 + $0xf0] sm:$0xff]
      %v809 = vld [vmem:[#allocation2 + $0xf8] sm:$0xff]
      %v810 = vadd.f32 %v746, %v778
      %v811 = vadd.f32 %v747, %v779
      %v812 = vadd.f32 %v748, %v780
      %v813 = vadd.f32 %v749, %v781
      %v814 = vadd.f32 %v750, %v782
      %v815 = vadd.f32 %v751, %v783
      %v816 = vadd.f32 %v752, %v784
      %v817 = vadd.f32 %v753, %v785
      %v818 = vadd.f32 %v754, %v786
      %v819 = vadd.f32 %v755, %v787
      %v820 = vadd.f32 %v756, %v788
      %v821 = vadd.f32 %v757, %v789
      %v822 = vadd.f32 %v758, %v790
      %v823 = vadd.f32 %v759, %v791
      %v824 = vadd.f32 %v760, %v792
      %v825 = vadd.f32 %v761, %v793
      %v826 = vadd.f32 %v762, %v794
      %v827 = vadd.f32 %v763, %v795
      %v828 = vadd.f32 %v764, %v796
      %v829 = vadd.f32 %v765, %v797
      %v830 = vadd.f32 %v766, %v798
      %v831 = vadd.f32 %v767, %v799
      %v832 = vadd.f32 %v768, %v800
      %v833 = vadd.f32 %v769, %v801
      %v834 = vadd.f32 %v770, %v802
      %v835 = vadd.f32 %v771, %v803
      %v836 = vadd.f32 %v772, %v804
      %v837 = vadd.f32 %v773, %v805
      %v838 = vadd.f32 %v774, %v806
      %v839 = vadd.f32 %v775, %v807
      %v840 = vadd.f32 %v776, %v808
      %v841 = vadd.f32 %v777, %v809
      %842 = vst [vmem:[%s4] sm:$0xff] %v810
      %843 = vst [vmem:[%s4 + $0x8] sm:$0xff] %v811
      %844 = vst [vmem:[%s4 + $0x10] sm:$0xff] %v812
      %845 = vst [vmem:[%s4 + $0x18] sm:$0xff] %v813
      %846 = vst [vmem:[%s4 + $0x20] sm:$0xff] %v814
      %847 = vst [vmem:[%s4 + $0x28] sm:$0xff] %v815
      %848 = vst [vmem:[%s4 + $0x30] sm:$0xff] %v816
      %849 = vst [vmem:[%s4 + $0x38] sm:$0xff] %v817
      %850 = vst [vmem:[%s4 + $0x40] sm:$0xff] %v818
      %851 = vst [vmem:[%s4 + $0x48] sm:$0xff] %v819
      %852 = vst [vmem:[%s4 + $0x50] sm:$0xff] %v820
      %853 = vst [vmem:[%s4 + $0x58] sm:$0xff] %v821
      %854 = vst [vmem:[%s4 + $0x60] sm:$0xff] %v822
      %855 = vst [vmem:[%s4 + $0x68] sm:$0xff] %v823
      %856 = vst [vmem:[%s4 + $0x70] sm:$0xff] %v824
      %857 = vst [vmem:[%s4 + $0x78] sm:$0xff] %v825
      %858 = vst [vmem:[%s4 + $0x80] sm:$0xff] %v826
      %859 = vst [vmem:[%s4 + $0x88] sm:$0xff] %v827
      %860 = vst [vmem:[%s4 + $0x90] sm:$0xff] %v828
      %861 = vst [vmem:[%s4 + $0x98] sm:$0xff] %v829
      %862 = vst [vmem:[%s4 + $0xa0] sm:$0xff] %v830
      %863 = vst [vmem:[%s4 + $0xa8] sm:$0xff] %v831
      %864 = vst [vmem:[%s4 + $0xb0] sm:$0xff] %v832
      %865 = vst [vmem:[%s4 + $0xb8] sm:$0xff] %v833
      %866 = vst [vmem:[%s4 + $0xc0] sm:$0xff] %v834
      %867 = vst [vmem:[%s4 + $0xc8] sm:$0xff] %v835
      %868 = vst [vmem:[%s4 + $0xd0] sm:$0xff] %v836
      %869 = vst [vmem:[%s4 + $0xd8] sm:$0xff] %v837
      %870 = vst [vmem:[%s4 + $0xe0] sm:$0xff] %v838
      %871 = vst [vmem:[%s4 + $0xe8] sm:$0xff] %v839
      %872 = vst [vmem:[%s4 + $0xf0] sm:$0xff] %v840
      %873 = vst [vmem:[%s4 + $0xf8] sm:$0xff] %v841
    $region21: #{_forward_impl.16} parent=1 // pred_fallthru
      _
    // Predicated region
    $region22: #{_forward_impl.16} parent=1 // pred_check
      _
    $region23: #{_forward_impl.16} parent=1 // pred_check_branch
      %875 = sbr.rel (0) target = $region25
    $region24: #{_forward_impl.16} parent=1 // pred_region
      %877 = vsyncadd [#allocation4], 0
      %s878 = sshll.u32 [#allocation3], 4
      %s879 = int_to_ptr.vmem [resolvable:$true] %s878
      %s880 = sshll.u32 %s3, 4
      %s881 = int_to_ptr.hbm [resolvable:$true] %s880
      %886 = dma.vmem_to_hbm [thread:$0]  %s879, 2048, %s881, [#allocation4], 64, 64, 4
    $region25: #{_forward_impl.16} parent=1 // pred_fallthru
      _
    // Predicated region
    $region26: #{_forward_impl.16} parent=1 // pred_check
      _
    $region27: #{_forward_impl.16} parent=1 // pred_check_branch
      %888 = sbr.rel (0) target = $region29
    $region28: #{_forward_impl.16} parent=1 // pred_region
      _
    $region29: #{_forward_impl.16} parent=1 // pred_fallthru
      _
    // Predicated region
    $region30: #{_forward_impl.16} parent=1 // pred_check
      _
    $region31: #{_forward_impl.16} parent=1 // pred_check_branch
      %890 = sbr.rel (0) target = $region33
    $region32: #{_forward_impl.16} parent=1 // pred_region
      %892 = dma.done [#allocation4], 2048
    $region33: #{_forward_impl.16} parent=1 // pred_fallthru
      _
    // Predicated region
    $region34: #{_forward_impl.16} parent=1 // pred_check
      _
    $region35: #{_forward_impl.16} parent=1 // pred_check_branch
      %894 = sbr.rel (0) target = $region37
    $region36: #{_forward_impl.16} parent=1 // pred_region
      _
    $region37: #{_forward_impl.16} parent=1 // pred_fallthru
      _
    %895 = vsyncpa [#allocation4], 1

</llo_original>
